<compile_context>
chip_gen: v7x
topology: tpu7x:2x2x1
jax: 0.10.0
libtpu: 0.0.40
codegen_flags: <defaults>
</compile_context>

<pallas_src>
import functools

import jax
import jax.numpy as jnp
from jax.experimental import pallas as pl
from jax.experimental.pallas import tpu as pltpu


def _round_up(x, m):
    return -(-x // m) * m


def _tail_a_kernel(x_ref, w1_ref, b1_ref, pm_ref, w2_ref, b2_ref, o_ref, *,
                   tap_offsets, cin2):
    """One batch tile (Bt2 image pairs).

    x_ref : (2C, Bt2*Sp)    image pairs; row = p*C + c, lane = j*Sp + q
    w1_ref: (9*2C, 2C)      per-tap block-diagonal 3x3 weights (tap-major rows)
    b1_ref: (2C, 1)         conv bias, stacked twice
    pm_ref: (Bt2*Sp, Bt2)   block-diag pooling matrix: 1/(H*W) at valid q
    w2_ref: (2*outdim, 2C)  block-diag 1x1 conv weight
    b2_ref: (2*outdim, 1)   1x1 conv bias, stacked twice
    o_ref : (2*outdim, Bt2) final output for this tile (single store)
    """
    x = x_ref[...]                                     # (2C, N2)
    n2 = x.shape[-1]
    w1 = w1_ref[...]                                   # load once (hoisted)

    acc = None
    for t, off in enumerate(tap_offsets):              # 9 taps, unrolled
        # lane roll of the whole slab; wraparound only contaminates positions
        # that the pooling matrix zeroes out (valid q + off < hwp <= Sp).
        xs = x if off == 0 else pltpu.roll(x, shift=n2 - off, axis=1)
        wt = w1[t * cin2:(t + 1) * cin2, :]            # (2C, 2C) aligned slice
        contrib = jnp.dot(wt, xs, preferred_element_type=jnp.float32)
        acc = contrib if acc is None else acc + contrib

    y = acc + b1_ref[...]                              # conv bias
    y = jnp.maximum(y, 0.01 * y)                       # LeakyReLU(0.01)

    # masked global average pool: one block-diagonal matmul -> (2C, Bt2)
    pooled = jnp.dot(y, pm_ref[...], preferred_element_type=jnp.float32)
    # fused 1x1 conv + bias -> (2*outdim, Bt2); single lane-dense store
    z = jnp.dot(w2_ref[...], pooled, preferred_element_type=jnp.float32)
    o_ref[...] = (z + b2_ref[...]).astype(o_ref.dtype)


def tail_layer_a(x, w1, b1, w2, b2, *, vmem_working_set_bytes=8 << 20):
    """Forward pass of tail_layer_A. x: (B, C, H, W) -> (B, outdim, 1, 1)."""
    B, C, H, W = x.shape
    outdim = w2.shape[0]
    Hp, Wp = H + 2, W + 2
    hwp = Hp * Wp
    Sp = _round_up(hwp, 128)          # per-image lane segment (flattened pad)
    C2 = 2 * C                        # two images per sublane group
    O2 = 2 * outdim
    out_dtype = x.dtype

    f32 = jnp.float32
    x = x.astype(f32)
    w1 = w1.astype(f32)
    b1 = b1.astype(f32)
    w2 = w2.astype(f32)
    b2 = b2.astype(f32)

    # ---- tile sizing from a padding-corrected VMEM budget -----------------
    rows_x = _round_up(C2, 8)         # sublane padding of the input block
    rows_o = _round_up(O2, 8)

    def working_set(bt2):
        in_b = rows_x * bt2 * Sp * 4
        pm_b = bt2 * Sp * _round_up(bt2, 128) * 4       # lane dim pads to 128
        out_b = rows_o * _round_up(bt2, 128) * 4
        const_b = (_round_up(9 * C2, 8) + rows_x + rows_o + 8) * 128 * 4
        return 2 * (in_b + pm_b + out_b + const_b)      # double-buffered

    bt2_cap = max(1, -(-B // 2))
    bt2 = 1
    for cand in range(1, min(128, bt2_cap) + 1):
        if working_set(cand) <= vmem_working_set_bytes:
            bt2 = cand
    Bt = 2 * bt2
    num_tiles = -(-B // Bt)
    if num_tiles == 1 and B >= 4:     # keep both v7x TensorCores busy
        bt2 = max(1, -(-B // 4))
        Bt = 2 * bt2
        num_tiles = -(-B // Bt)
    B_pad = num_tiles * Bt
    N2 = bt2 * Sp

    # ---- wrapper glue (plain XLA): pad, flatten, pair-pack -----------------
    x_pad = jnp.pad(x, ((0, B_pad - B), (0, 0), (1, 1), (1, 1)))
    x_flat = x_pad.reshape(B_pad, C, hwp)
    if Sp > hwp:
        x_flat = jnp.pad(x_flat, ((0, 0), (0, 0), (0, Sp - hwp)))
    # image b = t*Bt + 2*j + p  ->  tile t, lane segment j, sublane half p
    x_slab = (x_flat.reshape(num_tiles, bt2, 2, C, Sp)
              .transpose(0, 2, 3, 1, 4)
              .reshape(num_tiles, C2, N2))

    # per-tap (C, C) weights, tap t = dy*3 + dx; lane offset = dy*Wp + dx
    w_taps = jnp.transpose(w1, (2, 3, 0, 1)).reshape(9, C, C)
    zc = jnp.zeros((9, C, C), f32)
    w1_blk = jnp.concatenate(
        [jnp.concatenate([w_taps, zc], axis=2),
         jnp.concatenate([zc, w_taps], axis=2)], axis=1)     # (9, 2C, 2C)
    w1_stack = w1_blk.reshape(9 * C2, C2)                    # single 2-D weight

    b1_col = jnp.concatenate([b1, b1]).reshape(C2, 1)

    w2_mat = w2.reshape(outdim, C)
    zo = jnp.zeros((outdim, C), f32)
    w2_blk = jnp.concatenate(
        [jnp.concatenate([w2_mat, zo], axis=1),
         jnp.concatenate([zo, w2_mat], axis=1)], axis=0)     # (2*outdim, 2C)
    b2_col = jnp.concatenate([b2, b2]).reshape(O2, 1)

    # block-diagonal pooling matrix: pm[j*Sp + q, j] = 1/(H*W) at valid q
    q = jnp.arange(Sp, dtype=jnp.int32)
    pv = jnp.where((q < H * Wp) & ((q % Wp) < W),
                   1.0 / float(H * W), 0.0).astype(f32)
    pm = (pv[None, :, None] * jnp.eye(bt2, dtype=f32)[:, None, :]
          ).reshape(N2, bt2)

    tap_offsets = tuple(dy * Wp + dx for dy in range(3) for dx in range(3))
    kernel = functools.partial(_tail_a_kernel,
                               tap_offsets=tap_offsets, cin2=C2)

    vmem_limit = int(min(40 << 20, max(32 << 20, 2 * working_set(bt2))))

    out = pl.pallas_call(
        kernel,
        out_shape=jax.ShapeDtypeStruct((num_tiles, O2, bt2), f32),
        grid_spec=pltpu.PrefetchScalarGridSpec(
            num_scalar_prefetch=0,
            grid=(num_tiles,),
            in_specs=[
                pl.BlockSpec((None, C2, N2), lambda t: (t, 0, 0)),
                pl.BlockSpec((9 * C2, C2), lambda t: (0, 0)),
                pl.BlockSpec((C2, 1), lambda t: (0, 0)),
                pl.BlockSpec((N2, bt2), lambda t: (0, 0)),
                pl.BlockSpec((O2, C2), lambda t: (0, 0)),
                pl.BlockSpec((O2, 1), lambda t: (0, 0)),
            ],
            out_specs=pl.BlockSpec((None, O2, bt2), lambda t: (t, 0, 0)),
        ),
        compiler_params=pltpu.CompilerParams(
            dimension_semantics=("parallel",),
            vmem_limit_bytes=vmem_limit),
    )(x_slab, w1_stack, b1_col, pm, w2_blk, b2_col)

    # unscramble: rows p*outdim + o, lanes j  ->  image b = t*Bt + 2*j + p
    z = (out.reshape(num_tiles, 2, outdim, bt2)
         .transpose(0, 3, 1, 2)
         .reshape(B_pad, outdim)[:B])
    return z.astype(out_dtype).reshape(B, outdim, 1, 1)


def reference_forward(x, w1, b1, w2, b2):
    """Pure-JAX reference matching the PyTorch module (NCHW)."""
    C = x.shape[1]
    outdim = w2.shape[0]
    y = jax.lax.conv_general_dilated(
        x, w1, (1, 1), ((1, 1), (1, 1)),
        dimension_numbers=("NCHW", "OIHW", "NCHW"))
    y = y + b1.reshape(1, C, 1, 1)
    y = jnp.where(y > 0, y, 0.01 * y)
    y = jnp.mean(y, axis=(2, 3), keepdims=True)
    y = jax.lax.conv_general_dilated(
        y, w2, (1, 1), ((0, 0), (0, 0)),
        dimension_numbers=("NCHW", "OIHW", "NCHW"))
    y = y + b2.reshape(1, outdim, 1, 1)
    return y


if __name__ == "__main__":
    key = jax.random.PRNGKey(0)
    B, C, H, W, outdim = 2, 4, 16, 16, 1
    k1, k2, k3, k4, k5 = jax.random.split(key, 5)

    x = jax.random.normal(k1, (B, C, H, W), jnp.float32)

    # Deterministic init mimicking PyTorch Conv2d defaults (U(-1/sqrt(fan_in))).
    fan_in1 = C * 3 * 3
    bound1 = 1.0 / (fan_in1 ** 0.5)
    w1 = jax.random.uniform(k2, (C, C, 3, 3), jnp.float32, -bound1, bound1)
    b1 = jax.random.uniform(k3, (C,), jnp.float32, -bound1, bound1)

    fan_in2 = C
    bound2 = 1.0 / (fan_in2 ** 0.5)
    w2 = jax.random.uniform(k4, (outdim, C, 1, 1), jnp.float32, -bound2, bound2)
    b2 = jax.random.uniform(k5, (outdim,), jnp.float32, -bound2, bound2)

    out = jax.block_until_ready(tail_layer_a(x, w1, b1, w2, b2))
    ref = jax.block_until_ready(reference_forward(x, w1, b1, w2, b2))

    assert out.shape == (B, outdim, 1, 1), out.shape
    assert jnp.allclose(out, ref, atol=1e-4, rtol=1e-4), (
        f"max abs err {jnp.max(jnp.abs(out - ref))}")
    print("KERNEL_OK")
</pallas_src>

<mosaic_0001>
module attributes {stable_mosaic.version = 11 : i64} {
  func.func @_tail_a_kernel(%arg0: i32, %arg1: memref<1x8x384xf32, #tpu.memory_space<vmem>>, %arg2: memref<72x8xf32, #tpu.memory_space<vmem>>, %arg3: memref<8x1xf32, #tpu.memory_space<vmem>>, %arg4: memref<384x1xf32, #tpu.memory_space<vmem>>, %arg5: memref<2x8xf32, #tpu.memory_space<vmem>>, %arg6: memref<2x1xf32, #tpu.memory_space<vmem>>, %arg7: memref<1x2x1xf32, #tpu.memory_space<vmem>>) attributes {dimension_semantics = [#tpu.dimension_semantics<parallel>], iteration_bounds = array<i64: 1>, scalar_prefetch = 0 : i64, scratch_operands = 0 : i64, tpu.core_type = #tpu.core_type<tc>, window_params = [{transform_indices = @transform_0, window_bounds = array<i64: 1, 8, 384>}, {pipeline_mode = #tpu.pipeline_mode<synchronous>, transform_indices = @transform_1, window_bounds = array<i64: 72, 8>}, {pipeline_mode = #tpu.pipeline_mode<synchronous>, transform_indices = @transform_2, window_bounds = array<i64: 8, 1>}, {pipeline_mode = #tpu.pipeline_mode<synchronous>, transform_indices = @transform_3, window_bounds = array<i64: 384, 1>}, {pipeline_mode = #tpu.pipeline_mode<synchronous>, transform_indices = @transform_4, window_bounds = array<i64: 2, 8>}, {pipeline_mode = #tpu.pipeline_mode<synchronous>, transform_indices = @transform_5, window_bounds = array<i64: 2, 1>}, {transform_indices = @transform_6, window_bounds = array<i64: 1, 2, 1>}]} {
    %c0 = arith.constant 0 : index
    %c0_0 = arith.constant 0 : index
    %c0_1 = arith.constant 0 : index
    %0 = vector.load %arg1[%c0, %c0_0, %c0_1] : memref<1x8x384xf32, #tpu.memory_space<vmem>>, vector<1x8x384xf32>
    %1 = vector.shape_cast %0 : vector<1x8x384xf32> to vector<8x384xf32>
    %c0_2 = arith.constant 0 : index
    %c0_3 = arith.constant 0 : index
    %2 = vector.load %arg2[%c0_2, %c0_3] : memref<72x8xf32, #tpu.memory_space<vmem>>, vector<72x8xf32>
    %3 = vector.extract_strided_slice %2 {offsets = [0, 0], sizes = [8, 8], strides = [1, 1]} : vector<72x8xf32> to vector<8x8xf32>
    %cst = arith.constant dense<0.000000e+00> : vector<8x384xf32>
    %4 = tpu.matmul %3, %1, %cst {dimension_numbers = #tpu.dot_dimension_numbers<[1], [0], [0], [1], [0, 0, 1, 1], [], []>} : vector<8x8xf32>, vector<8x384xf32>, vector<8x384xf32> -> vector<8x384xf32>
    %c383_i32 = arith.constant 383 : i32
    %5 = tpu.dynamic_rotate %1 by %c383_i32 dim 1 : vector<8x384xf32>, i32 -> vector<8x384xf32>
    %6 = vector.extract_strided_slice %2 {offsets = [8, 0], sizes = [8, 8], strides = [1, 1]} : vector<72x8xf32> to vector<8x8xf32>
    %cst_4 = arith.constant dense<0.000000e+00> : vector<8x384xf32>
    %7 = tpu.matmul %6, %5, %cst_4 {dimension_numbers = #tpu.dot_dimension_numbers<[1], [0], [0], [1], [0, 0, 1, 1], [], []>} : vector<8x8xf32>, vector<8x384xf32>, vector<8x384xf32> -> vector<8x384xf32>
    %8 = arith.addf %4, %7 : vector<8x384xf32>
    %c382_i32 = arith.constant 382 : i32
    %9 = tpu.dynamic_rotate %1 by %c382_i32 dim 1 : vector<8x384xf32>, i32 -> vector<8x384xf32>
    %10 = vector.extract_strided_slice %2 {offsets = [16, 0], sizes = [8, 8], strides = [1, 1]} : vector<72x8xf32> to vector<8x8xf32>
    %cst_5 = arith.constant dense<0.000000e+00> : vector<8x384xf32>
    %11 = tpu.matmul %10, %9, %cst_5 {dimension_numbers = #tpu.dot_dimension_numbers<[1], [0], [0], [1], [0, 0, 1, 1], [], []>} : vector<8x8xf32>, vector<8x384xf32>, vector<8x384xf32> -> vector<8x384xf32>
    %12 = arith.addf %8, %11 : vector<8x384xf32>
    %c366_i32 = arith.constant 366 : i32
    %13 = tpu.dynamic_rotate %1 by %c366_i32 dim 1 : vector<8x384xf32>, i32 -> vector<8x384xf32>
    %14 = vector.extract_strided_slice %2 {offsets = [24, 0], sizes = [8, 8], strides = [1, 1]} : vector<72x8xf32> to vector<8x8xf32>
    %cst_6 = arith.constant dense<0.000000e+00> : vector<8x384xf32>
    %15 = tpu.matmul %14, %13, %cst_6 {dimension_numbers = #tpu.dot_dimension_numbers<[1], [0], [0], [1], [0, 0, 1, 1], [], []>} : vector<8x8xf32>, vector<8x384xf32>, vector<8x384xf32> -> vector<8x384xf32>
    %16 = arith.addf %12, %15 : vector<8x384xf32>
    %c365_i32 = arith.constant 365 : i32
    %17 = tpu.dynamic_rotate %1 by %c365_i32 dim 1 : vector<8x384xf32>, i32 -> vector<8x384xf32>
    %18 = vector.extract_strided_slice %2 {offsets = [32, 0], sizes = [8, 8], strides = [1, 1]} : vector<72x8xf32> to vector<8x8xf32>
    %cst_7 = arith.constant dense<0.000000e+00> : vector<8x384xf32>
    %19 = tpu.matmul %18, %17, %cst_7 {dimension_numbers = #tpu.dot_dimension_numbers<[1], [0], [0], [1], [0, 0, 1, 1], [], []>} : vector<8x8xf32>, vector<8x384xf32>, vector<8x384xf32> -> vector<8x384xf32>
    %20 = arith.addf %16, %19 : vector<8x384xf32>
    %c364_i32 = arith.constant 364 : i32
    %21 = tpu.dynamic_rotate %1 by %c364_i32 dim 1 : vector<8x384xf32>, i32 -> vector<8x384xf32>
    %22 = vector.extract_strided_slice %2 {offsets = [40, 0], sizes = [8, 8], strides = [1, 1]} : vector<72x8xf32> to vector<8x8xf32>
    %cst_8 = arith.constant dense<0.000000e+00> : vector<8x384xf32>
    %23 = tpu.matmul %22, %21, %cst_8 {dimension_numbers = #tpu.dot_dimension_numbers<[1], [0], [0], [1], [0, 0, 1, 1], [], []>} : vector<8x8xf32>, vector<8x384xf32>, vector<8x384xf32> -> vector<8x384xf32>
    %24 = arith.addf %20, %23 : vector<8x384xf32>
    %c348_i32 = arith.constant 348 : i32
    %25 = tpu.dynamic_rotate %1 by %c348_i32 dim 1 : vector<8x384xf32>, i32 -> vector<8x384xf32>
    %26 = vector.extract_strided_slice %2 {offsets = [48, 0], sizes = [8, 8], strides = [1, 1]} : vector<72x8xf32> to vector<8x8xf32>
    %cst_9 = arith.constant dense<0.000000e+00> : vector<8x384xf32>
    %27 = tpu.matmul %26, %25, %cst_9 {dimension_numbers = #tpu.dot_dimension_numbers<[1], [0], [0], [1], [0, 0, 1, 1], [], []>} : vector<8x8xf32>, vector<8x384xf32>, vector<8x384xf32> -> vector<8x384xf32>
    %28 = arith.addf %24, %27 : vector<8x384xf32>
    %c347_i32 = arith.constant 347 : i32
    %29 = tpu.dynamic_rotate %1 by %c347_i32 dim 1 : vector<8x384xf32>, i32 -> vector<8x384xf32>
    %30 = vector.extract_strided_slice %2 {offsets = [56, 0], sizes = [8, 8], strides = [1, 1]} : vector<72x8xf32> to vector<8x8xf32>
    %cst_10 = arith.constant dense<0.000000e+00> : vector<8x384xf32>
    %31 = tpu.matmul %30, %29, %cst_10 {dimension_numbers = #tpu.dot_dimension_numbers<[1], [0], [0], [1], [0, 0, 1, 1], [], []>} : vector<8x8xf32>, vector<8x384xf32>, vector<8x384xf32> -> vector<8x384xf32>
    %32 = arith.addf %28, %31 : vector<8x384xf32>
    %c346_i32 = arith.constant 346 : i32
    %33 = tpu.dynamic_rotate %1 by %c346_i32 dim 1 : vector<8x384xf32>, i32 -> vector<8x384xf32>
    %34 = vector.extract_strided_slice %2 {offsets = [64, 0], sizes = [8, 8], strides = [1, 1]} : vector<72x8xf32> to vector<8x8xf32>
    %cst_11 = arith.constant dense<0.000000e+00> : vector<8x384xf32>
    %35 = tpu.matmul %34, %33, %cst_11 {dimension_numbers = #tpu.dot_dimension_numbers<[1], [0], [0], [1], [0, 0, 1, 1], [], []>} : vector<8x8xf32>, vector<8x384xf32>, vector<8x384xf32> -> vector<8x384xf32>
    %36 = arith.addf %32, %35 : vector<8x384xf32>
    %c0_12 = arith.constant 0 : index
    %c0_13 = arith.constant 0 : index
    %37 = vector.load %arg3[%c0_12, %c0_13] : memref<8x1xf32, #tpu.memory_space<vmem>>, vector<8x1xf32>
    %38 = vector.broadcast %37 : vector<8x1xf32> to vector<8x384xf32>
    %39 = arith.addf %36, %38 : vector<8x384xf32>
    %cst_14 = arith.constant 0.00999999977 : f32
    %40 = vector.broadcast %cst_14 : f32 to vector<8x384xf32>
    %41 = arith.mulf %40, %39 : vector<8x384xf32>
    %42 = arith.maximumf %39, %41 : vector<8x384xf32>
    %c0_15 = arith.constant 0 : index
    %c0_16 = arith.constant 0 : index
    %43 = vector.load %arg4[%c0_15, %c0_16] : memref<384x1xf32, #tpu.memory_space<vmem>>, vector<384x1xf32>
    %cst_17 = arith.constant dense<0.000000e+00> : vector<8x1xf32>
    %44 = tpu.matmul %42, %43, %cst_17 {dimension_numbers = #tpu.dot_dimension_numbers<[1], [0], [0], [1], [0, 0, 1, 1], [], []>} : vector<8x384xf32>, vector<384x1xf32>, vector<8x1xf32> -> vector<8x1xf32>
    %c0_18 = arith.constant 0 : index
    %c0_19 = arith.constant 0 : index
    %45 = vector.load %arg5[%c0_18, %c0_19] : memref<2x8xf32, #tpu.memory_space<vmem>>, vector<2x8xf32>
    %cst_20 = arith.constant dense<0.000000e+00> : vector<2x1xf32>
    %46 = tpu.matmul %45, %44, %cst_20 {dimension_numbers = #tpu.dot_dimension_numbers<[1], [0], [0], [1], [0, 0, 1, 1], [], []>} : vector<2x8xf32>, vector<8x1xf32>, vector<2x1xf32> -> vector<2x1xf32>
    %c0_21 = arith.constant 0 : index
    %c0_22 = arith.constant 0 : index
    %47 = vector.load %arg6[%c0_21, %c0_22] : memref<2x1xf32, #tpu.memory_space<vmem>>, vector<2x1xf32>
    %48 = arith.addf %46, %47 : vector<2x1xf32>
    %c0_23 = arith.constant 0 : index
    %c0_24 = arith.constant 0 : index
    %c0_25 = arith.constant 0 : index
    %49 = vector.load %arg7[%c0_23, %c0_24, %c0_25] : memref<1x2x1xf32, #tpu.memory_space<vmem>>, vector<1x2x1xf32>
    %50 = vector.shape_cast %49 : vector<1x2x1xf32> to vector<2x1xf32>
    %51 = vector.shape_cast %48 : vector<2x1xf32> to vector<1x2x1xf32>
    tpu.vector_store %arg7[%c0_23, %c0_24, %c0_25], %51 {strides = array<i32>} : memref<1x2x1xf32, #tpu.memory_space<vmem>>, vector<1x2x1xf32>,
    return
  }
  func.func @transform_0(%arg0: i32) -> (i32, i32, i32) {
    %c0_i32 = arith.constant 0 : i32
    %c0_i32_0 = arith.constant 0 : i32
    %c0_i32_1 = arith.constant 0 : i32
    return %arg0, %c0_i32, %c0_i32_0 : i32, i32, i32
  }
  func.func @transform_1(%arg0: i32) -> (i32, i32) {
    %c0_i32 = arith.constant 0 : i32
    %c0_i32_0 = arith.constant 0 : i32
    %c0_i32_1 = arith.constant 0 : i32
    return %c0_i32, %c0_i32_0 : i32, i32
  }
  func.func @transform_2(%arg0: i32) -> (i32, i32) {
    %c0_i32 = arith.constant 0 : i32
    %c0_i32_0 = arith.constant 0 : i32
    %c0_i32_1 = arith.constant 0 : i32
    return %c0_i32, %c0_i32_0 : i32, i32
  }
  func.func @transform_3(%arg0: i32) -> (i32, i32) {
    %c0_i32 = arith.constant 0 : i32
    %c0_i32_0 = arith.constant 0 : i32
    %c0_i32_1 = arith.constant 0 : i32
    return %c0_i32, %c0_i32_0 : i32, i32
  }
  func.func @transform_4(%arg0: i32) -> (i32, i32) {
    %c0_i32 = arith.constant 0 : i32
    %c0_i32_0 = arith.constant 0 : i32
    %c0_i32_1 = arith.constant 0 : i32
    return %c0_i32, %c0_i32_0 : i32, i32
  }
  func.func @transform_5(%arg0: i32) -> (i32, i32) {
    %c0_i32 = arith.constant 0 : i32
    %c0_i32_0 = arith.constant 0 : i32
    %c0_i32_1 = arith.constant 0 : i32
    return %c0_i32, %c0_i32_0 : i32, i32
  }
  func.func @transform_6(%arg0: i32) -> (i32, i32, i32) {
    %c0_i32 = arith.constant 0 : i32
    %c0_i32_0 = arith.constant 0 : i32
    %c0_i32_1 = arith.constant 0 : i32
    return %arg0, %c0_i32, %c0_i32_0 : i32, i32, i32
  }
}

</mosaic_0001>

<llo_original>
// kernel: tpu_custom_call.1
$region0: #{tpu_custom_call.1}
  #allocation0 [shape = 'u32[]', space=smem, size = 0x4, offset = 0x4, fixed_abs, tag = 'smem constant byte address 0x4 - core index']
  #allocation1 [shape = 'u32[144,128]{1,0:T(1,128)}', space=vmem, size = 0x12000, scoped, tag = 'internal scratch']
  %s0 = inlined_call_operand.vmem [shape: f32[1,8,384], index: 0, kind: input, shape index: {}]
  %s1 = inlined_call_operand.vmem [shape: f32[72,8], index: 1, kind: input, shape index: {}]
  %s2 = inlined_call_operand.vmem [shape: f32[8,1], index: 2, kind: input, shape index: {}]
  %s3 = inlined_call_operand.vmem [shape: f32[384,1], index: 3, kind: input, shape index: {}]
  %s4 = inlined_call_operand.vmem [shape: f32[2,8], index: 4, kind: input, shape index: {}]
  %s5 = inlined_call_operand.vmem [shape: f32[2,1], index: 5, kind: input, shape index: {}]
  %s6 = inlined_call_operand.vmem [shape: f32[1,2,1], index: 6, kind: output, shape index: {}]
  %s7 = sld [smem:[#allocation0]]
  $region34: #{tpu_custom_call.1} parent=0
    _
  %s9 = ssub.s32 1, %s7
  %s10 = scalar_select 0, %s9, %s7
  // Predicated region
  $region2: #{tpu_custom_call.1} parent=0 // pred_check
    _
  $region3: #{tpu_custom_call.1} parent=0 // pred_check_branch
    %12 = sbr.rel (0) target = $region5
  $region4: #{tpu_custom_call.1} parent=0 // pred_region
    _
  $region5: #{tpu_custom_call.1} parent=0 // pred_fallthru
    _
  // Predicated region
  $region6: #{tpu_custom_call.1} parent=0 // pred_check
    _
  $region7: #{tpu_custom_call.1} parent=0 // pred_check_branch
    %14 = sbr.rel (0) target = $region9
  $region8: #{tpu_custom_call.1} parent=0 // pred_region
    _
  $region9: #{tpu_custom_call.1} parent=0 // pred_fallthru
    _
  // Predicated region
  $region10: #{tpu_custom_call.1} parent=0 // pred_check
    _
  $region11: #{tpu_custom_call.1} parent=0 // pred_check_branch
    %16 = sbr.rel (0) target = $region13
  $region12: #{tpu_custom_call.1} parent=0 // pred_region
    _
  $region13: #{tpu_custom_call.1} parent=0 // pred_fallthru
    _
  // Predicated region
  $region14: #{tpu_custom_call.1} parent=0 // pred_check
    _
  $region15: #{tpu_custom_call.1} parent=0 // pred_check_branch
    %18 = sbr.rel (0) target = $region17
  $region16: #{tpu_custom_call.1} parent=0 // pred_region
    _
  $region17: #{tpu_custom_call.1} parent=0 // pred_fallthru
    _
  // Predicated region
  $region18: #{tpu_custom_call.1} parent=0 // pred_check
    _
  $region19: #{tpu_custom_call.1} parent=0 // pred_check_branch
    %20 = sbr.rel (0) target = $region21
  $region20: #{tpu_custom_call.1} parent=0 // pred_region
    _
  $region21: #{tpu_custom_call.1} parent=0 // pred_fallthru
    _
  // Predicated region
  $region22: #{tpu_custom_call.1} parent=0 // pred_check
    _
  $region23: #{tpu_custom_call.1} parent=0 // pred_check_branch
    %22 = sbr.rel (0) target = $region25
  $region24: #{tpu_custom_call.1} parent=0 // pred_region
    _
  $region25: #{tpu_custom_call.1} parent=0 // pred_fallthru
    _
  %v23 = vld [vmem:[%s0] sm:$0xff]
  %v24 = vld [vmem:[%s0 + $0x8] sm:$0xff]
  %v25 = vld [vmem:[%s0 + $0x10] sm:$0xff]
  %v26 = vld [vmem:[%s1] sm:$0xff]
  %v27 = vld [vmem:[%s1 + $0x8] sm:$0xff]
  %v28 = vld [vmem:[%s1 + $0x10] sm:$0xff]
  %v29 = vld [vmem:[%s1 + $0x18] sm:$0xff]
  %v30 = vld [vmem:[%s1 + $0x20] sm:$0xff]
  %v31 = vld [vmem:[%s1 + $0x28] sm:$0xff]
  %v32 = vld [vmem:[%s1 + $0x30] sm:$0xff]
  %v33 = vld [vmem:[%s1 + $0x38] sm:$0xff]
  %v34 = vld [vmem:[%s1 + $0x40] sm:$0xff]
  %35 = vrot.lane.b32.xlu0 %v23, 127
  %v36 = vpop.permute.xlu0 %35
  %37 = vrot.lane.b32.xlu0 %v24, 127
  %v38 = vpop.permute.xlu0 %37
  %39 = vrot.lane.b32.xlu0 %v25, 127
  %v40 = vpop.permute.xlu0 %39
  %v41 = vlaneseq
  %v42 = vand.u32 %v41, 127
  %vm43 = vcmp.lt.s32.totalorder %v42, 127
  %v44 = vsel %vm43, %v38, %v40
  %v45 = vsel %vm43, %v36, %v38
  %v46 = vsel %vm43, %v40, %v36
  %vm47 = vcmask 64512
  %v49 = vsel %vm47, %v27, 0
  %51 = vmatprep.subr.mxu0 %v44
  %52 = vmatpush1.msra.mxu0 %v45
  %53 = vmatprep.subr.mxu0 0.0
  %54 = vmatpush1.msra.mxu0 0.0
  %55 = vmatprep.subr.mxu0 0.0
  %56 = vmatpush1.msra.mxu0 0.0
  %57 = vmatprep.subr.mxu0 0.0
  %58 = vmatpush1.msra.mxu0 0.0
  %59 = vmatprep.subr.mxu0 0.0
  %60 = vmatpush1.msra.mxu0 0.0
  %61 = vmatprep.subr.mxu0 0.0
  %62 = vmatpush1.msra.mxu0 0.0
  %63 = vmatprep.subr.mxu0 0.0
  %64 = vmatpush1.msra.mxu0 0.0
  %65 = vmatprep.subr.mxu0 0.0
  %66 = vmatpush1.msra.mxu0 0.0
  %67 = vmatprep.subr.mxu0 0.0
  %68 = vmatpush1.msra.mxu0 0.0
  %69 = vmatprep.subr.mxu0 0.0
  %70 = vmatpush1.msra.mxu0 0.0
  %71 = vmatprep.subr.mxu0 0.0
  %72 = vmatpush1.msra.mxu0 0.0
  %73 = vmatprep.subr.mxu0 0.0
  %74 = vmatpush1.msra.mxu0 0.0
  %75 = vmatprep.subr.mxu0 0.0
  %76 = vmatpush1.msra.mxu0 0.0
  %77 = vmatprep.subr.mxu0 0.0
  %78 = vmatpush1.msra.mxu0 0.0
  %79 = vmatprep.subr.mxu0 0.0
  %80 = vmatpush1.msra.mxu0 0.0
  %81 = vmatprep.subr.mxu0 0.0
  %82 = vmatpush1.msra.mxu0 0.0
  %83 = vmatprep.subr.mxu0 0.0
  %84 = vmatpush1.msra.mxu0 0.0
  %85 = vmatprep.subr.mxu0 0.0
  %86 = vmatpush1.msra.mxu0 0.0
  %87 = vmatprep.subr.mxu0 0.0
  %88 = vmatpush1.msra.mxu0 0.0
  %89 = vmatprep.subr.mxu0 0.0
  %90 = vmatpush1.msra.mxu0 0.0
  %91 = vmatprep.subr.mxu0 0.0
  %92 = vmatpush1.msra.mxu0 0.0
  %93 = vmatprep.subr.mxu0 0.0
  %94 = vmatpush1.msra.mxu0 0.0
  %95 = vmatprep.subr.mxu0 0.0
  %96 = vmatpush1.msra.mxu0 0.0
  %97 = vmatprep.subr.mxu0 0.0
  %98 = vmatpush1.msra.mxu0 0.0
  %99 = vmatprep.subr.mxu0 0.0
  %100 = vmatpush1.msra.mxu0 0.0
  %101 = vmatprep.subr.mxu0 0.0
  %102 = vmatpush1.msra.mxu0 0.0
  %103 = vmatprep.subr.mxu0 0.0
  %104 = vmatpush1.msra.mxu0 0.0
  %105 = vmatprep.subr.mxu0 0.0
  %106 = vmatpush1.msra.mxu0 0.0
  %107 = vmatprep.subr.mxu0 0.0
  %108 = vmatpush1.msra.mxu0 0.0
  %109 = vmatprep.subr.mxu0 0.0
  %110 = vmatpush1.msra.mxu0 0.0
  %111 = vmatprep.subr.mxu0 0.0
  %112 = vmatpush1.msra.mxu0 0.0
  %113 = vmatprep.subr.mxu0 0.0
  %114 = vmatpush1.msra.mxu0 0.0
  %115 = vmatprep.mubr.f32.mxu0 0.0
  %116 = vmatmul.mubr.f32.gmra.mrb[0].mxu0 %v49
  %v117 = vpop.f32.mrb[0].mxu0
  %v118 = vadd.f32 0.0, %v117
  %v119 = vpop.f32.mrb[0].mxu0
  %v120 = vadd.f32 0.0, %v119
  %121 = vdwg.mxu0
  %122 = vmatprep.subr.mxu0 0.0
  %123 = vmatpush1.msra.mxu0 %v46
  %124 = vmatprep.subr.mxu0 0.0
  %125 = vmatpush1.msra.mxu0 0.0
  %126 = vmatprep.subr.mxu0 0.0
  %127 = vmatpush1.msra.mxu0 0.0
  %128 = vmatprep.subr.mxu0 0.0
  %129 = vmatpush1.msra.mxu0 0.0
  %130 = vmatprep.subr.mxu0 0.0
  %131 = vmatpush1.msra.mxu0 0.0
  %132 = vmatprep.subr.mxu0 0.0
  %133 = vmatpush1.msra.mxu0 0.0
  %134 = vmatprep.subr.mxu0 0.0
  %135 = vmatpush1.msra.mxu0 0.0
  %136 = vmatprep.subr.mxu0 0.0
  %137 = vmatpush1.msra.mxu0 0.0
  %138 = vmatprep.subr.mxu0 0.0
  %139 = vmatpush1.msra.mxu0 0.0
  %140 = vmatprep.subr.mxu0 0.0
  %141 = vmatpush1.msra.mxu0 0.0
  %142 = vmatprep.subr.mxu0 0.0
  %143 = vmatpush1.msra.mxu0 0.0
  %144 = vmatprep.subr.mxu0 0.0
  %145 = vmatpush1.msra.mxu0 0.0
  %146 = vmatprep.subr.mxu0 0.0
  %147 = vmatpush1.msra.mxu0 0.0
  %148 = vmatprep.subr.mxu0 0.0
  %149 = vmatpush1.msra.mxu0 0.0
  %150 = vmatprep.subr.mxu0 0.0
  %151 = vmatpush1.msra.mxu0 0.0
  %152 = vmatprep.subr.mxu0 0.0
  %153 = vmatpush1.msra.mxu0 0.0
  %154 = vmatprep.subr.mxu0 0.0
  %155 = vmatpush1.msra.mxu0 0.0
  %156 = vmatprep.subr.mxu0 0.0
  %157 = vmatpush1.msra.mxu0 0.0
  %158 = vmatprep.subr.mxu0 0.0
  %159 = vmatpush1.msra.mxu0 0.0
  %160 = vmatprep.subr.mxu0 0.0
  %161 = vmatpush1.msra.mxu0 0.0
  %162 = vmatprep.subr.mxu0 0.0
  %163 = vmatpush1.msra.mxu0 0.0
  %164 = vmatprep.subr.mxu0 0.0
  %165 = vmatpush1.msra.mxu0 0.0
  %166 = vmatprep.subr.mxu0 0.0
  %167 = vmatpush1.msra.mxu0 0.0
  %168 = vmatprep.subr.mxu0 0.0
  %169 = vmatpush1.msra.mxu0 0.0
  %170 = vmatprep.subr.mxu0 0.0
  %171 = vmatpush1.msra.mxu0 0.0
  %172 = vmatprep.subr.mxu0 0.0
  %173 = vmatpush1.msra.mxu0 0.0
  %174 = vmatprep.subr.mxu0 0.0
  %175 = vmatpush1.msra.mxu0 0.0
  %176 = vmatprep.subr.mxu0 0.0
  %177 = vmatpush1.msra.mxu0 0.0
  %178 = vmatprep.subr.mxu0 0.0
  %179 = vmatpush1.msra.mxu0 0.0
  %180 = vmatprep.subr.mxu0 0.0
  %181 = vmatpush1.msra.mxu0 0.0
  %182 = vmatprep.subr.mxu0 0.0
  %183 = vmatpush1.msra.mxu0 0.0
  %184 = vmatprep.subr.mxu0 0.0
  %185 = vmatpush1.msra.mxu0 0.0
  %186 = vmatprep.mubr.f32.mxu0 0.0
  %187 = vmatmul.mubr.f32.gmra.mrb[0].mxu0 %v49
  %v188 = vpop.f32.mrb[0].mxu0
  %v189 = vadd.f32 0.0, %v188
  %v190 = vpop.f32.mrb[0].mxu0
  %191 = vdwg.mxu0
  %v193 = vsel %vm47, %v26, 0
  %195 = vmatprep.subr.mxu0 %v24
  %196 = vmatpush1.msra.mxu0 %v23
  %197 = vmatprep.subr.mxu0 0.0
  %198 = vmatpush1.msra.mxu0 0.0
  %199 = vmatprep.subr.mxu0 0.0
  %200 = vmatpush1.msra.mxu0 0.0
  %201 = vmatprep.subr.mxu0 0.0
  %202 = vmatpush1.msra.mxu0 0.0
  %203 = vmatprep.subr.mxu0 0.0
  %204 = vmatpush1.msra.mxu0 0.0
  %205 = vmatprep.subr.mxu0 0.0
  %206 = vmatpush1.msra.mxu0 0.0
  %207 = vmatprep.subr.mxu0 0.0
  %208 = vmatpush1.msra.mxu0 0.0
  %209 = vmatprep.subr.mxu0 0.0
  %210 = vmatpush1.msra.mxu0 0.0
  %211 = vmatprep.subr.mxu0 0.0
  %212 = vmatpush1.msra.mxu0 0.0
  %213 = vmatprep.subr.mxu0 0.0
  %214 = vmatpush1.msra.mxu0 0.0
  %215 = vmatprep.subr.mxu0 0.0
  %216 = vmatpush1.msra.mxu0 0.0
  %217 = vmatprep.subr.mxu0 0.0
  %218 = vmatpush1.msra.mxu0 0.0
  %219 = vmatprep.subr.mxu0 0.0
  %220 = vmatpush1.msra.mxu0 0.0
  %221 = vmatprep.subr.mxu0 0.0
  %222 = vmatpush1.msra.mxu0 0.0
  %223 = vmatprep.subr.mxu0 0.0
  %224 = vmatpush1.msra.mxu0 0.0
  %225 = vmatprep.subr.mxu0 0.0
  %226 = vmatpush1.msra.mxu0 0.0
  %227 = vmatprep.subr.mxu0 0.0
  %228 = vmatpush1.msra.mxu0 0.0
  %229 = vmatprep.subr.mxu0 0.0
  %230 = vmatpush1.msra.mxu0 0.0
  %231 = vmatprep.subr.mxu0 0.0
  %232 = vmatpush1.msra.mxu0 0.0
  %233 = vmatprep.subr.mxu0 0.0
  %234 = vmatpush1.msra.mxu0 0.0
  %235 = vmatprep.subr.mxu0 0.0
  %236 = vmatpush1.msra.mxu0 0.0
  %237 = vmatprep.subr.mxu0 0.0
  %238 = vmatpush1.msra.mxu0 0.0
  %239 = vmatprep.subr.mxu0 0.0
  %240 = vmatpush1.msra.mxu0 0.0
  %241 = vmatprep.subr.mxu0 0.0
  %242 = vmatpush1.msra.mxu0 0.0
  %243 = vmatprep.subr.mxu0 0.0
  %244 = vmatpush1.msra.mxu0 0.0
  %245 = vmatprep.subr.mxu0 0.0
  %246 = vmatpush1.msra.mxu0 0.0
  %247 = vmatprep.subr.mxu0 0.0
  %248 = vmatpush1.msra.mxu0 0.0
  %249 = vmatprep.subr.mxu0 0.0
  %250 = vmatpush1.msra.mxu0 0.0
  %251 = vmatprep.subr.mxu0 0.0
  %252 = vmatpush1.msra.mxu0 0.0
  %253 = vmatprep.subr.mxu0 0.0
  %254 = vmatpush1.msra.mxu0 0.0
  %255 = vmatprep.subr.mxu0 0.0
  %256 = vmatpush1.msra.mxu0 0.0
  %257 = vmatprep.subr.mxu0 0.0
  %258 = vmatpush1.msra.mxu0 0.0
  %259 = vmatprep.mubr.f32.mxu0 0.0
  %260 = vmatmul.mubr.f32.gmra.mrb[0].mxu0 %v193
  %v261 = vpop.f32.mrb[0].mxu0
  %v262 = vadd.f32 %v118, %v261
  %v263 = vpop.f32.mrb[0].mxu0
  %v264 = vadd.f32 %v120, %v263
  %265 = vdwg.mxu0
  %266 = vmatprep.subr.mxu0 0.0
  %267 = vmatpush1.msra.mxu0 %v25
  %268 = vmatprep.subr.mxu0 0.0
  %269 = vmatpush1.msra.mxu0 0.0
  %270 = vmatprep.subr.mxu0 0.0
  %271 = vmatpush1.msra.mxu0 0.0
  %272 = vmatprep.subr.mxu0 0.0
  %273 = vmatpush1.msra.mxu0 0.0
  %274 = vmatprep.subr.mxu0 0.0
  %275 = vmatpush1.msra.mxu0 0.0
  %276 = vmatprep.subr.mxu0 0.0
  %277 = vmatpush1.msra.mxu0 0.0
  %278 = vmatprep.subr.mxu0 0.0
  %279 = vmatpush1.msra.mxu0 0.0
  %280 = vmatprep.subr.mxu0 0.0
  %281 = vmatpush1.msra.mxu0 0.0
  %282 = vmatprep.subr.mxu0 0.0
  %283 = vmatpush1.msra.mxu0 0.0
  %284 = vmatprep.subr.mxu0 0.0
  %285 = vmatpush1.msra.mxu0 0.0
  %286 = vmatprep.subr.mxu0 0.0
  %287 = vmatpush1.msra.mxu0 0.0
  %288 = vmatprep.subr.mxu0 0.0
  %289 = vmatpush1.msra.mxu0 0.0
  %290 = vmatprep.subr.mxu0 0.0
  %291 = vmatpush1.msra.mxu0 0.0
  %292 = vmatprep.subr.mxu0 0.0
  %293 = vmatpush1.msra.mxu0 0.0
  %294 = vmatprep.subr.mxu0 0.0
  %295 = vmatpush1.msra.mxu0 0.0
  %296 = vmatprep.subr.mxu0 0.0
  %297 = vmatpush1.msra.mxu0 0.0
  %298 = vmatprep.subr.mxu0 0.0
  %299 = vmatpush1.msra.mxu0 0.0
  %300 = vmatprep.subr.mxu0 0.0
  %301 = vmatpush1.msra.mxu0 0.0
  %302 = vmatprep.subr.mxu0 0.0
  %303 = vmatpush1.msra.mxu0 0.0
  %304 = vmatprep.subr.mxu0 0.0
  %305 = vmatpush1.msra.mxu0 0.0
  %306 = vmatprep.subr.mxu0 0.0
  %307 = vmatpush1.msra.mxu0 0.0
  %308 = vmatprep.subr.mxu0 0.0
  %309 = vmatpush1.msra.mxu0 0.0
  %310 = vmatprep.subr.mxu0 0.0
  %311 = vmatpush1.msra.mxu0 0.0
  %312 = vmatprep.subr.mxu0 0.0
  %313 = vmatpush1.msra.mxu0 0.0
  %314 = vmatprep.subr.mxu0 0.0
  %315 = vmatpush1.msra.mxu0 0.0
  %316 = vmatprep.subr.mxu0 0.0
  %317 = vmatpush1.msra.mxu0 0.0
  %318 = vmatprep.subr.mxu0 0.0
  %319 = vmatpush1.msra.mxu0 0.0
  %320 = vmatprep.subr.mxu0 0.0
  %321 = vmatpush1.msra.mxu0 0.0
  %322 = vmatprep.subr.mxu0 0.0
  %323 = vmatpush1.msra.mxu0 0.0
  %324 = vmatprep.subr.mxu0 0.0
  %325 = vmatpush1.msra.mxu0 0.0
  %326 = vmatprep.subr.mxu0 0.0
  %327 = vmatpush1.msra.mxu0 0.0
  %328 = vmatprep.subr.mxu0 0.0
  %329 = vmatpush1.msra.mxu0 0.0
  %330 = vmatprep.mubr.f32.mxu0 0.0
  %331 = vmatmul.mubr.f32.gmra.mrb[0].mxu0 %v193
  %v332 = vpop.f32.mrb[0].mxu0
  %v333 = vadd.f32 %v189, %v332
  %v334 = vpop.f32.mrb[0].mxu0
  %335 = vdwg.mxu0
  %336 = vrot.lane.b32.xlu0 %v23, 126
  %v337 = vpop.permute.xlu0 %336
  %338 = vrot.lane.b32.xlu0 %v24, 126
  %v339 = vpop.permute.xlu0 %338
  %340 = vrot.lane.b32.xlu0 %v25, 126
  %v341 = vpop.permute.xlu0 %340
  %vm342 = vcmp.lt.s32.totalorder %v42, 126
  %v343 = vsel %vm342, %v339, %v341
  %v344 = vsel %vm342, %v337, %v339
  %v345 = vsel %vm342, %v341, %v337
  %v347 = vsel %vm47, %v28, 0
  %349 = vmatprep.subr.mxu0 %v343
  %350 = vmatpush1.msra.mxu0 %v344
  %351 = vmatprep.subr.mxu0 0.0
  %352 = vmatpush1.msra.mxu0 0.0
  %353 = vmatprep.subr.mxu0 0.0
  %354 = vmatpush1.msra.mxu0 0.0
  %355 = vmatprep.subr.mxu0 0.0
  %356 = vmatpush1.msra.mxu0 0.0
  %357 = vmatprep.subr.mxu0 0.0
  %358 = vmatpush1.msra.mxu0 0.0
  %359 = vmatprep.subr.mxu0 0.0
  %360 = vmatpush1.msra.mxu0 0.0
  %361 = vmatprep.subr.mxu0 0.0
  %362 = vmatpush1.msra.mxu0 0.0
  %363 = vmatprep.subr.mxu0 0.0
  %364 = vmatpush1.msra.mxu0 0.0
  %365 = vmatprep.subr.mxu0 0.0
  %366 = vmatpush1.msra.mxu0 0.0
  %367 = vmatprep.subr.mxu0 0.0
  %368 = vmatpush1.msra.mxu0 0.0
  %369 = vmatprep.subr.mxu0 0.0
  %370 = vmatpush1.msra.mxu0 0.0
  %371 = vmatprep.subr.mxu0 0.0
  %372 = vmatpush1.msra.mxu0 0.0
  %373 = vmatprep.subr.mxu0 0.0
  %374 = vmatpush1.msra.mxu0 0.0
  %375 = vmatprep.subr.mxu0 0.0
  %376 = vmatpush1.msra.mxu0 0.0
  %377 = vmatprep.subr.mxu0 0.0
  %378 = vmatpush1.msra.mxu0 0.0
  %379 = vmatprep.subr.mxu0 0.0
  %380 = vmatpush1.msra.mxu0 0.0
  %381 = vmatprep.subr.mxu0 0.0
  %382 = vmatpush1.msra.mxu0 0.0
  %383 = vmatprep.subr.mxu0 0.0
  %384 = vmatpush1.msra.mxu0 0.0
  %385 = vmatprep.subr.mxu0 0.0
  %386 = vmatpush1.msra.mxu0 0.0
  %387 = vmatprep.subr.mxu0 0.0
  %388 = vmatpush1.msra.mxu0 0.0
  %389 = vmatprep.subr.mxu0 0.0
  %390 = vmatpush1.msra.mxu0 0.0
  %391 = vmatprep.subr.mxu0 0.0
  %392 = vmatpush1.msra.mxu0 0.0
  %393 = vmatprep.subr.mxu0 0.0
  %394 = vmatpush1.msra.mxu0 0.0
  %395 = vmatprep.subr.mxu0 0.0
  %396 = vmatpush1.msra.mxu0 0.0
  %397 = vmatprep.subr.mxu0 0.0
  %398 = vmatpush1.msra.mxu0 0.0
  %399 = vmatprep.subr.mxu0 0.0
  %400 = vmatpush1.msra.mxu0 0.0
  %401 = vmatprep.subr.mxu0 0.0
  %402 = vmatpush1.msra.mxu0 0.0
  %403 = vmatprep.subr.mxu0 0.0
  %404 = vmatpush1.msra.mxu0 0.0
  %405 = vmatprep.subr.mxu0 0.0
  %406 = vmatpush1.msra.mxu0 0.0
  %407 = vmatprep.subr.mxu0 0.0
  %408 = vmatpush1.msra.mxu0 0.0
  %409 = vmatprep.subr.mxu0 0.0
  %410 = vmatpush1.msra.mxu0 0.0
  %411 = vmatprep.subr.mxu0 0.0
  %412 = vmatpush1.msra.mxu0 0.0
  %413 = vmatprep.mubr.f32.mxu0 0.0
  %414 = vmatmul.mubr.f32.gmra.mrb[0].mxu0 %v347
  %v415 = vpop.f32.mrb[0].mxu0
  %v416 = vadd.f32 0.0, %v415
  %v417 = vpop.f32.mrb[0].mxu0
  %v418 = vadd.f32 0.0, %v417
  %419 = vdwg.mxu0
  %420 = vmatprep.subr.mxu0 0.0
  %421 = vmatpush1.msra.mxu0 %v345
  %422 = vmatprep.subr.mxu0 0.0
  %423 = vmatpush1.msra.mxu0 0.0
  %424 = vmatprep.subr.mxu0 0.0
  %425 = vmatpush1.msra.mxu0 0.0
  %426 = vmatprep.subr.mxu0 0.0
  %427 = vmatpush1.msra.mxu0 0.0
  %428 = vmatprep.subr.mxu0 0.0
  %429 = vmatpush1.msra.mxu0 0.0
  %430 = vmatprep.subr.mxu0 0.0
  %431 = vmatpush1.msra.mxu0 0.0
  %432 = vmatprep.subr.mxu0 0.0
  %433 = vmatpush1.msra.mxu0 0.0
  %434 = vmatprep.subr.mxu0 0.0
  %435 = vmatpush1.msra.mxu0 0.0
  %436 = vmatprep.subr.mxu0 0.0
  %437 = vmatpush1.msra.mxu0 0.0
  %438 = vmatprep.subr.mxu0 0.0
  %439 = vmatpush1.msra.mxu0 0.0
  %440 = vmatprep.subr.mxu0 0.0
  %441 = vmatpush1.msra.mxu0 0.0
  %442 = vmatprep.subr.mxu0 0.0
  %443 = vmatpush1.msra.mxu0 0.0
  %444 = vmatprep.subr.mxu0 0.0
  %445 = vmatpush1.msra.mxu0 0.0
  %446 = vmatprep.subr.mxu0 0.0
  %447 = vmatpush1.msra.mxu0 0.0
  %448 = vmatprep.subr.mxu0 0.0
  %449 = vmatpush1.msra.mxu0 0.0
  %450 = vmatprep.subr.mxu0 0.0
  %451 = vmatpush1.msra.mxu0 0.0
  %452 = vmatprep.subr.mxu0 0.0
  %453 = vmatpush1.msra.mxu0 0.0
  %454 = vmatprep.subr.mxu0 0.0
  %455 = vmatpush1.msra.mxu0 0.0
  %456 = vmatprep.subr.mxu0 0.0
  %457 = vmatpush1.msra.mxu0 0.0
  %458 = vmatprep.subr.mxu0 0.0
  %459 = vmatpush1.msra.mxu0 0.0
  %460 = vmatprep.subr.mxu0 0.0
  %461 = vmatpush1.msra.mxu0 0.0
  %462 = vmatprep.subr.mxu0 0.0
  %463 = vmatpush1.msra.mxu0 0.0
  %464 = vmatprep.subr.mxu0 0.0
  %465 = vmatpush1.msra.mxu0 0.0
  %466 = vmatprep.subr.mxu0 0.0
  %467 = vmatpush1.msra.mxu0 0.0
  %468 = vmatprep.subr.mxu0 0.0
  %469 = vmatpush1.msra.mxu0 0.0
  %470 = vmatprep.subr.mxu0 0.0
  %471 = vmatpush1.msra.mxu0 0.0
  %472 = vmatprep.subr.mxu0 0.0
  %473 = vmatpush1.msra.mxu0 0.0
  %474 = vmatprep.subr.mxu0 0.0
  %475 = vmatpush1.msra.mxu0 0.0
  %476 = vmatprep.subr.mxu0 0.0
  %477 = vmatpush1.msra.mxu0 0.0
  %478 = vmatprep.subr.mxu0 0.0
  %479 = vmatpush1.msra.mxu0 0.0
  %480 = vmatprep.subr.mxu0 0.0
  %481 = vmatpush1.msra.mxu0 0.0
  %482 = vmatprep.subr.mxu0 0.0
  %483 = vmatpush1.msra.mxu0 0.0
  %484 = vmatprep.mubr.f32.mxu0 0.0
  %485 = vmatmul.mubr.f32.gmra.mrb[0].mxu0 %v347
  %v486 = vpop.f32.mrb[0].mxu0
  %v487 = vadd.f32 0.0, %v486
  %v488 = vpop.f32.mrb[0].mxu0
  %489 = vdwg.mxu0
  %v490 = vadd.f32 %v262, %v416
  %v491 = vadd.f32 %v264, %v418
  %v492 = vadd.f32 %v333, %v487
  %493 = vrot.lane.b32.xlu0 %v23, 110
  %v494 = vpop.permute.xlu0 %493
  %495 = vrot.lane.b32.xlu0 %v24, 110
  %v496 = vpop.permute.xlu0 %495
  %497 = vrot.lane.b32.xlu0 %v25, 110
  %v498 = vpop.permute.xlu0 %497
  %vm499 = vcmp.lt.s32.totalorder %v42, 110
  %v500 = vsel %vm499, %v496, %v498
  %v501 = vsel %vm499, %v494, %v496
  %v502 = vsel %vm499, %v498, %v494
  %v504 = vsel %vm47, %v29, 0
  %506 = vmatprep.subr.mxu0 %v500
  %507 = vmatpush1.msra.mxu0 %v501
  %508 = vmatprep.subr.mxu0 0.0
  %509 = vmatpush1.msra.mxu0 0.0
  %510 = vmatprep.subr.mxu0 0.0
  %511 = vmatpush1.msra.mxu0 0.0
  %512 = vmatprep.subr.mxu0 0.0
  %513 = vmatpush1.msra.mxu0 0.0
  %514 = vmatprep.subr.mxu0 0.0
  %515 = vmatpush1.msra.mxu0 0.0
  %516 = vmatprep.subr.mxu0 0.0
  %517 = vmatpush1.msra.mxu0 0.0
  %518 = vmatprep.subr.mxu0 0.0
  %519 = vmatpush1.msra.mxu0 0.0
  %520 = vmatprep.subr.mxu0 0.0
  %521 = vmatpush1.msra.mxu0 0.0
  %522 = vmatprep.subr.mxu0 0.0
  %523 = vmatpush1.msra.mxu0 0.0
  %524 = vmatprep.subr.mxu0 0.0
  %525 = vmatpush1.msra.mxu0 0.0
  %526 = vmatprep.subr.mxu0 0.0
  %527 = vmatpush1.msra.mxu0 0.0
  %528 = vmatprep.subr.mxu0 0.0
  %529 = vmatpush1.msra.mxu0 0.0
  %530 = vmatprep.subr.mxu0 0.0
  %531 = vmatpush1.msra.mxu0 0.0
  %532 = vmatprep.subr.mxu0 0.0
  %533 = vmatpush1.msra.mxu0 0.0
  %534 = vmatprep.subr.mxu0 0.0
  %535 = vmatpush1.msra.mxu0 0.0
  %536 = vmatprep.subr.mxu0 0.0
  %537 = vmatpush1.msra.mxu0 0.0
  %538 = vmatprep.subr.mxu0 0.0
  %539 = vmatpush1.msra.mxu0 0.0
  %540 = vmatprep.subr.mxu0 0.0
  %541 = vmatpush1.msra.mxu0 0.0
  %542 = vmatprep.subr.mxu0 0.0
  %543 = vmatpush1.msra.mxu0 0.0
  %544 = vmatprep.subr.mxu0 0.0
  %545 = vmatpush1.msra.mxu0 0.0
  %546 = vmatprep.subr.mxu0 0.0
  %547 = vmatpush1.msra.mxu0 0.0
  %548 = vmatprep.subr.mxu0 0.0
  %549 = vmatpush1.msra.mxu0 0.0
  %550 = vmatprep.subr.mxu0 0.0
  %551 = vmatpush1.msra.mxu0 0.0
  %552 = vmatprep.subr.mxu0 0.0
  %553 = vmatpush1.msra.mxu0 0.0
  %554 = vmatprep.subr.mxu0 0.0
  %555 = vmatpush1.msra.mxu0 0.0
  %556 = vmatprep.subr.mxu0 0.0
  %557 = vmatpush1.msra.mxu0 0.0
  %558 = vmatprep.subr.mxu0 0.0
  %559 = vmatpush1.msra.mxu0 0.0
  %560 = vmatprep.subr.mxu0 0.0
  %561 = vmatpush1.msra.mxu0 0.0
  %562 = vmatprep.subr.mxu0 0.0
  %563 = vmatpush1.msra.mxu0 0.0
  %564 = vmatprep.subr.mxu0 0.0
  %565 = vmatpush1.msra.mxu0 0.0
  %566 = vmatprep.subr.mxu0 0.0
  %567 = vmatpush1.msra.mxu0 0.0
  %568 = vmatprep.subr.mxu0 0.0
  %569 = vmatpush1.msra.mxu0 0.0
  %570 = vmatprep.mubr.f32.mxu0 0.0
  %571 = vmatmul.mubr.f32.gmra.mrb[0].mxu0 %v504
  %v572 = vpop.f32.mrb[0].mxu0
  %v573 = vadd.f32 0.0, %v572
  %v574 = vpop.f32.mrb[0].mxu0
  %v575 = vadd.f32 0.0, %v574
  %576 = vdwg.mxu0
  %577 = vmatprep.subr.mxu0 0.0
  %578 = vmatpush1.msra.mxu0 %v502
  %579 = vmatprep.subr.mxu0 0.0
  %580 = vmatpush1.msra.mxu0 0.0
  %581 = vmatprep.subr.mxu0 0.0
  %582 = vmatpush1.msra.mxu0 0.0
  %583 = vmatprep.subr.mxu0 0.0
  %584 = vmatpush1.msra.mxu0 0.0
  %585 = vmatprep.subr.mxu0 0.0
  %586 = vmatpush1.msra.mxu0 0.0
  %587 = vmatprep.subr.mxu0 0.0
  %588 = vmatpush1.msra.mxu0 0.0
  %589 = vmatprep.subr.mxu0 0.0
  %590 = vmatpush1.msra.mxu0 0.0
  %591 = vmatprep.subr.mxu0 0.0
  %592 = vmatpush1.msra.mxu0 0.0
  %593 = vmatprep.subr.mxu0 0.0
  %594 = vmatpush1.msra.mxu0 0.0
  %595 = vmatprep.subr.mxu0 0.0
  %596 = vmatpush1.msra.mxu0 0.0
  %597 = vmatprep.subr.mxu0 0.0
  %598 = vmatpush1.msra.mxu0 0.0
  %599 = vmatprep.subr.mxu0 0.0
  %600 = vmatpush1.msra.mxu0 0.0
  %601 = vmatprep.subr.mxu0 0.0
  %602 = vmatpush1.msra.mxu0 0.0
  %603 = vmatprep.subr.mxu0 0.0
  %604 = vmatpush1.msra.mxu0 0.0
  %605 = vmatprep.subr.mxu0 0.0
  %606 = vmatpush1.msra.mxu0 0.0
  %607 = vmatprep.subr.mxu0 0.0
  %608 = vmatpush1.msra.mxu0 0.0
  %609 = vmatprep.subr.mxu0 0.0
  %610 = vmatpush1.msra.mxu0 0.0
  %611 = vmatprep.subr.mxu0 0.0
  %612 = vmatpush1.msra.mxu0 0.0
  %613 = vmatprep.subr.mxu0 0.0
  %614 = vmatpush1.msra.mxu0 0.0
  %615 = vmatprep.subr.mxu0 0.0
  %616 = vmatpush1.msra.mxu0 0.0
  %617 = vmatprep.subr.mxu0 0.0
  %618 = vmatpush1.msra.mxu0 0.0
  %619 = vmatprep.subr.mxu0 0.0
  %620 = vmatpush1.msra.mxu0 0.0
  %621 = vmatprep.subr.mxu0 0.0
  %622 = vmatpush1.msra.mxu0 0.0
  %623 = vmatprep.subr.mxu0 0.0
  %624 = vmatpush1.msra.mxu0 0.0
  %625 = vmatprep.subr.mxu0 0.0
  %626 = vmatpush1.msra.mxu0 0.0
  %627 = vmatprep.subr.mxu0 0.0
  %628 = vmatpush1.msra.mxu0 0.0
  %629 = vmatprep.subr.mxu0 0.0
  %630 = vmatpush1.msra.mxu0 0.0
  %631 = vmatprep.subr.mxu0 0.0
  %632 = vmatpush1.msra.mxu0 0.0
  %633 = vmatprep.subr.mxu0 0.0
  %634 = vmatpush1.msra.mxu0 0.0
  %635 = vmatprep.subr.mxu0 0.0
  %636 = vmatpush1.msra.mxu0 0.0
  %637 = vmatprep.subr.mxu0 0.0
  %638 = vmatpush1.msra.mxu0 0.0
  %639 = vmatprep.subr.mxu0 0.0
  %640 = vmatpush1.msra.mxu0 0.0
  %641 = vmatprep.mubr.f32.mxu0 0.0
  %642 = vmatmul.mubr.f32.gmra.mrb[0].mxu0 %v504
  %v643 = vpop.f32.mrb[0].mxu0
  %v644 = vadd.f32 0.0, %v643
  %v645 = vpop.f32.mrb[0].mxu0
  %646 = vdwg.mxu0
  %v647 = vadd.f32 %v490, %v573
  %v648 = vadd.f32 %v491, %v575
  %v649 = vadd.f32 %v492, %v644
  %650 = vrot.lane.b32.xlu0 %v23, 109
  %v651 = vpop.permute.xlu0 %650
  %652 = vrot.lane.b32.xlu0 %v24, 109
  %v653 = vpop.permute.xlu0 %652
  %654 = vrot.lane.b32.xlu0 %v25, 109
  %v655 = vpop.permute.xlu0 %654
  %vm656 = vcmp.lt.s32.totalorder %v42, 109
  %v657 = vsel %vm656, %v653, %v655
  %v658 = vsel %vm656, %v651, %v653
  %v659 = vsel %vm656, %v655, %v651
  %v661 = vsel %vm47, %v30, 0
  %663 = vmatprep.subr.mxu0 %v657
  %664 = vmatpush1.msra.mxu0 %v658
  %665 = vmatprep.subr.mxu0 0.0
  %666 = vmatpush1.msra.mxu0 0.0
  %667 = vmatprep.subr.mxu0 0.0
  %668 = vmatpush1.msra.mxu0 0.0
  %669 = vmatprep.subr.mxu0 0.0
  %670 = vmatpush1.msra.mxu0 0.0
  %671 = vmatprep.subr.mxu0 0.0
  %672 = vmatpush1.msra.mxu0 0.0
  %673 = vmatprep.subr.mxu0 0.0
  %674 = vmatpush1.msra.mxu0 0.0
  %675 = vmatprep.subr.mxu0 0.0
  %676 = vmatpush1.msra.mxu0 0.0
  %677 = vmatprep.subr.mxu0 0.0
  %678 = vmatpush1.msra.mxu0 0.0
  %679 = vmatprep.subr.mxu0 0.0
  %680 = vmatpush1.msra.mxu0 0.0
  %681 = vmatprep.subr.mxu0 0.0
  %682 = vmatpush1.msra.mxu0 0.0
  %683 = vmatprep.subr.mxu0 0.0
  %684 = vmatpush1.msra.mxu0 0.0
  %685 = vmatprep.subr.mxu0 0.0
  %686 = vmatpush1.msra.mxu0 0.0
  %687 = vmatprep.subr.mxu0 0.0
  %688 = vmatpush1.msra.mxu0 0.0
  %689 = vmatprep.subr.mxu0 0.0
  %690 = vmatpush1.msra.mxu0 0.0
  %691 = vmatprep.subr.mxu0 0.0
  %692 = vmatpush1.msra.mxu0 0.0
  %693 = vmatprep.subr.mxu0 0.0
  %694 = vmatpush1.msra.mxu0 0.0
  %695 = vmatprep.subr.mxu0 0.0
  %696 = vmatpush1.msra.mxu0 0.0
  %697 = vmatprep.subr.mxu0 0.0
  %698 = vmatpush1.msra.mxu0 0.0
  %699 = vmatprep.subr.mxu0 0.0
  %700 = vmatpush1.msra.mxu0 0.0
  %701 = vmatprep.subr.mxu0 0.0
  %702 = vmatpush1.msra.mxu0 0.0
  %703 = vmatprep.subr.mxu0 0.0
  %704 = vmatpush1.msra.mxu0 0.0
  %705 = vmatprep.subr.mxu0 0.0
  %706 = vmatpush1.msra.mxu0 0.0
  %707 = vmatprep.subr.mxu0 0.0
  %708 = vmatpush1.msra.mxu0 0.0
  %709 = vmatprep.subr.mxu0 0.0
  %710 = vmatpush1.msra.mxu0 0.0
  %711 = vmatprep.subr.mxu0 0.0
  %712 = vmatpush1.msra.mxu0 0.0
  %713 = vmatprep.subr.mxu0 0.0
  %714 = vmatpush1.msra.mxu0 0.0
  %715 = vmatprep.subr.mxu0 0.0
  %716 = vmatpush1.msra.mxu0 0.0
  %717 = vmatprep.subr.mxu0 0.0
  %718 = vmatpush1.msra.mxu0 0.0
  %719 = vmatprep.subr.mxu0 0.0
  %720 = vmatpush1.msra.mxu0 0.0
  %721 = vmatprep.subr.mxu0 0.0
  %722 = vmatpush1.msra.mxu0 0.0
  %723 = vmatprep.subr.mxu0 0.0
  %724 = vmatpush1.msra.mxu0 0.0
  %725 = vmatprep.subr.mxu0 0.0
  %726 = vmatpush1.msra.mxu0 0.0
  %727 = vmatprep.mubr.f32.mxu0 0.0
  %728 = vmatmul.mubr.f32.gmra.mrb[0].mxu0 %v661
  %v729 = vpop.f32.mrb[0].mxu0
  %v730 = vadd.f32 0.0, %v729
  %v731 = vpop.f32.mrb[0].mxu0
  %v732 = vadd.f32 0.0, %v731
  %733 = vdwg.mxu0
  %734 = vmatprep.subr.mxu0 0.0
  %735 = vmatpush1.msra.mxu0 %v659
  %736 = vmatprep.subr.mxu0 0.0
  %737 = vmatpush1.msra.mxu0 0.0
  %738 = vmatprep.subr.mxu0 0.0
  %739 = vmatpush1.msra.mxu0 0.0
  %740 = vmatprep.subr.mxu0 0.0
  %741 = vmatpush1.msra.mxu0 0.0
  %742 = vmatprep.subr.mxu0 0.0
  %743 = vmatpush1.msra.mxu0 0.0
  %744 = vmatprep.subr.mxu0 0.0
  %745 = vmatpush1.msra.mxu0 0.0
  %746 = vmatprep.subr.mxu0 0.0
  %747 = vmatpush1.msra.mxu0 0.0
  %748 = vmatprep.subr.mxu0 0.0
  %749 = vmatpush1.msra.mxu0 0.0
  %750 = vmatprep.subr.mxu0 0.0
  %751 = vmatpush1.msra.mxu0 0.0
  %752 = vmatprep.subr.mxu0 0.0
  %753 = vmatpush1.msra.mxu0 0.0
  %754 = vmatprep.subr.mxu0 0.0
  %755 = vmatpush1.msra.mxu0 0.0
  %756 = vmatprep.subr.mxu0 0.0
  %757 = vmatpush1.msra.mxu0 0.0
  %758 = vmatprep.subr.mxu0 0.0
  %759 = vmatpush1.msra.mxu0 0.0
  %760 = vmatprep.subr.mxu0 0.0
  %761 = vmatpush1.msra.mxu0 0.0
  %762 = vmatprep.subr.mxu0 0.0
  %763 = vmatpush1.msra.mxu0 0.0
  %764 = vmatprep.subr.mxu0 0.0
  %765 = vmatpush1.msra.mxu0 0.0
  %766 = vmatprep.subr.mxu0 0.0
  %767 = vmatpush1.msra.mxu0 0.0
  %768 = vmatprep.subr.mxu0 0.0
  %769 = vmatpush1.msra.mxu0 0.0
  %770 = vmatprep.subr.mxu0 0.0
  %771 = vmatpush1.msra.mxu0 0.0
  %772 = vmatprep.subr.mxu0 0.0
  %773 = vmatpush1.msra.mxu0 0.0
  %774 = vmatprep.subr.mxu0 0.0
  %775 = vmatpush1.msra.mxu0 0.0
  %776 = vmatprep.subr.mxu0 0.0
  %777 = vmatpush1.msra.mxu0 0.0
  %778 = vmatprep.subr.mxu0 0.0
  %779 = vmatpush1.msra.mxu0 0.0
  %780 = vmatprep.subr.mxu0 0.0
  %781 = vmatpush1.msra.mxu0 0.0
  %782 = vmatprep.subr.mxu0 0.0
  %783 = vmatpush1.msra.mxu0 0.0
  %784 = vmatprep.subr.mxu0 0.0
  %785 = vmatpush1.msra.mxu0 0.0
  %786 = vmatprep.subr.mxu0 0.0
  %787 = vmatpush1.msra.mxu0 0.0
  %788 = vmatprep.subr.mxu0 0.0
  %789 = vmatpush1.msra.mxu0 0.0
  %790 = vmatprep.subr.mxu0 0.0
  %791 = vmatpush1.msra.mxu0 0.0
  %792 = vmatprep.subr.mxu0 0.0
  %793 = vmatpush1.msra.mxu0 0.0
  %794 = vmatprep.subr.mxu0 0.0
  %795 = vmatpush1.msra.mxu0 0.0
  %796 = vmatprep.subr.mxu0 0.0
  %797 = vmatpush1.msra.mxu0 0.0
  %798 = vmatprep.mubr.f32.mxu0 0.0
  %799 = vmatmul.mubr.f32.gmra.mrb[0].mxu0 %v661
  %v800 = vpop.f32.mrb[0].mxu0
  %v801 = vadd.f32 0.0, %v800
  %v802 = vpop.f32.mrb[0].mxu0
  %803 = vdwg.mxu0
  %v804 = vadd.f32 %v647, %v730
  %v805 = vadd.f32 %v648, %v732
  %v806 = vadd.f32 %v649, %v801
  %807 = vrot.lane.b32.xlu0 %v23, 108
  %v808 = vpop.permute.xlu0 %807
  %809 = vrot.lane.b32.xlu0 %v24, 108
  %v810 = vpop.permute.xlu0 %809
  %811 = vrot.lane.b32.xlu0 %v25, 108
  %v812 = vpop.permute.xlu0 %811
  %vm813 = vcmp.lt.s32.totalorder %v42, 108
  %v814 = vsel %vm813, %v810, %v812
  %v815 = vsel %vm813, %v808, %v810
  %v816 = vsel %vm813, %v812, %v808
  %v818 = vsel %vm47, %v31, 0
  %820 = vmatprep.subr.mxu0 %v814
  %821 = vmatpush1.msra.mxu0 %v815
  %822 = vmatprep.subr.mxu0 0.0
  %823 = vmatpush1.msra.mxu0 0.0
  %824 = vmatprep.subr.mxu0 0.0
  %825 = vmatpush1.msra.mxu0 0.0
  %826 = vmatprep.subr.mxu0 0.0
  %827 = vmatpush1.msra.mxu0 0.0
  %828 = vmatprep.subr.mxu0 0.0
  %829 = vmatpush1.msra.mxu0 0.0
  %830 = vmatprep.subr.mxu0 0.0
  %831 = vmatpush1.msra.mxu0 0.0
  %832 = vmatprep.subr.mxu0 0.0
  %833 = vmatpush1.msra.mxu0 0.0
  %834 = vmatprep.subr.mxu0 0.0
  %835 = vmatpush1.msra.mxu0 0.0
  %836 = vmatprep.subr.mxu0 0.0
  %837 = vmatpush1.msra.mxu0 0.0
  %838 = vmatprep.subr.mxu0 0.0
  %839 = vmatpush1.msra.mxu0 0.0
  %840 = vmatprep.subr.mxu0 0.0
  %841 = vmatpush1.msra.mxu0 0.0
  %842 = vmatprep.subr.mxu0 0.0
  %843 = vmatpush1.msra.mxu0 0.0
  %844 = vmatprep.subr.mxu0 0.0
  %845 = vmatpush1.msra.mxu0 0.0
  %846 = vmatprep.subr.mxu0 0.0
  %847 = vmatpush1.msra.mxu0 0.0
  %848 = vmatprep.subr.mxu0 0.0
  %849 = vmatpush1.msra.mxu0 0.0
  %850 = vmatprep.subr.mxu0 0.0
  %851 = vmatpush1.msra.mxu0 0.0
  %852 = vmatprep.subr.mxu0 0.0
  %853 = vmatpush1.msra.mxu0 0.0
  %854 = vmatprep.subr.mxu0 0.0
  %855 = vmatpush1.msra.mxu0 0.0
  %856 = vmatprep.subr.mxu0 0.0
  %857 = vmatpush1.msra.mxu0 0.0
  %858 = vmatprep.subr.mxu0 0.0
  %859 = vmatpush1.msra.mxu0 0.0
  %860 = vmatprep.subr.mxu0 0.0
  %861 = vmatpush1.msra.mxu0 0.0
  %862 = vmatprep.subr.mxu0 0.0
  %863 = vmatpush1.msra.mxu0 0.0
  %864 = vmatprep.subr.mxu0 0.0
  %865 = vmatpush1.msra.mxu0 0.0
  %866 = vmatprep.subr.mxu0 0.0
  %867 = vmatpush1.msra.mxu0 0.0
  %868 = vmatprep.subr.mxu0 0.0
  %869 = vmatpush1.msra.mxu0 0.0
  %870 = vmatprep.subr.mxu0 0.0
  %871 = vmatpush1.msra.mxu0 0.0
  %872 = vmatprep.subr.mxu0 0.0
  %873 = vmatpush1.msra.mxu0 0.0
  %874 = vmatprep.subr.mxu0 0.0
  %875 = vmatpush1.msra.mxu0 0.0
  %876 = vmatprep.subr.mxu0 0.0
  %877 = vmatpush1.msra.mxu0 0.0
  %878 = vmatprep.subr.mxu0 0.0
  %879 = vmatpush1.msra.mxu0 0.0
  %880 = vmatprep.subr.mxu0 0.0
  %881 = vmatpush1.msra.mxu0 0.0
  %882 = vmatprep.subr.mxu0 0.0
  %883 = vmatpush1.msra.mxu0 0.0
  %884 = vmatprep.mubr.f32.mxu0 0.0
  %885 = vmatmul.mubr.f32.gmra.mrb[0].mxu0 %v818
  %v886 = vpop.f32.mrb[0].mxu0
  %v887 = vadd.f32 0.0, %v886
  %v888 = vpop.f32.mrb[0].mxu0
  %v889 = vadd.f32 0.0, %v888
  %890 = vdwg.mxu0
  %891 = vmatprep.subr.mxu0 0.0
  %892 = vmatpush1.msra.mxu0 %v816
  %893 = vmatprep.subr.mxu0 0.0
  %894 = vmatpush1.msra.mxu0 0.0
  %895 = vmatprep.subr.mxu0 0.0
  %896 = vmatpush1.msra.mxu0 0.0
  %897 = vmatprep.subr.mxu0 0.0
  %898 = vmatpush1.msra.mxu0 0.0
  %899 = vmatprep.subr.mxu0 0.0
  %900 = vmatpush1.msra.mxu0 0.0
  %901 = vmatprep.subr.mxu0 0.0
  %902 = vmatpush1.msra.mxu0 0.0
  %903 = vmatprep.subr.mxu0 0.0
  %904 = vmatpush1.msra.mxu0 0.0
  %905 = vmatprep.subr.mxu0 0.0
  %906 = vmatpush1.msra.mxu0 0.0
  %907 = vmatprep.subr.mxu0 0.0
  %908 = vmatpush1.msra.mxu0 0.0
  %909 = vmatprep.subr.mxu0 0.0
  %910 = vmatpush1.msra.mxu0 0.0
  %911 = vmatprep.subr.mxu0 0.0
  %912 = vmatpush1.msra.mxu0 0.0
  %913 = vmatprep.subr.mxu0 0.0
  %914 = vmatpush1.msra.mxu0 0.0
  %915 = vmatprep.subr.mxu0 0.0
  %916 = vmatpush1.msra.mxu0 0.0
  %917 = vmatprep.subr.mxu0 0.0
  %918 = vmatpush1.msra.mxu0 0.0
  %919 = vmatprep.subr.mxu0 0.0
  %920 = vmatpush1.msra.mxu0 0.0
  %921 = vmatprep.subr.mxu0 0.0
  %922 = vmatpush1.msra.mxu0 0.0
  %923 = vmatprep.subr.mxu0 0.0
  %924 = vmatpush1.msra.mxu0 0.0
  %925 = vmatprep.subr.mxu0 0.0
  %926 = vmatpush1.msra.mxu0 0.0
  %927 = vmatprep.subr.mxu0 0.0
  %928 = vmatpush1.msra.mxu0 0.0
  %929 = vmatprep.subr.mxu0 0.0
  %930 = vmatpush1.msra.mxu0 0.0
  %931 = vmatprep.subr.mxu0 0.0
  %932 = vmatpush1.msra.mxu0 0.0
  %933 = vmatprep.subr.mxu0 0.0
  %934 = vmatpush1.msra.mxu0 0.0
  %935 = vmatprep.subr.mxu0 0.0
  %936 = vmatpush1.msra.mxu0 0.0
  %937 = vmatprep.subr.mxu0 0.0
  %938 = vmatpush1.msra.mxu0 0.0
  %939 = vmatprep.subr.mxu0 0.0
  %940 = vmatpush1.msra.mxu0 0.0
  %941 = vmatprep.subr.mxu0 0.0
  %942 = vmatpush1.msra.mxu0 0.0
  %943 = vmatprep.subr.mxu0 0.0
  %944 = vmatpush1.msra.mxu0 0.0
  %945 = vmatprep.subr.mxu0 0.0
  %946 = vmatpush1.msra.mxu0 0.0
  %947 = vmatprep.subr.mxu0 0.0
  %948 = vmatpush1.msra.mxu0 0.0
  %949 = vmatprep.subr.mxu0 0.0
  %950 = vmatpush1.msra.mxu0 0.0
  %951 = vmatprep.subr.mxu0 0.0
  %952 = vmatpush1.msra.mxu0 0.0
  %953 = vmatprep.subr.mxu0 0.0
  %954 = vmatpush1.msra.mxu0 0.0
  %955 = vmatprep.mubr.f32.mxu0 0.0
  %956 = vmatmul.mubr.f32.gmra.mrb[0].mxu0 %v818
  %v957 = vpop.f32.mrb[0].mxu0
  %v958 = vadd.f32 0.0, %v957
  %v959 = vpop.f32.mrb[0].mxu0
  %960 = vdwg.mxu0
  %v961 = vadd.f32 %v804, %v887
  %v962 = vadd.f32 %v805, %v889
  %v963 = vadd.f32 %v806, %v958
  %964 = vrot.lane.b32.xlu0 %v23, 92
  %v965 = vpop.permute.xlu0 %964
  %966 = vrot.lane.b32.xlu0 %v24, 92
  %v967 = vpop.permute.xlu0 %966
  %968 = vrot.lane.b32.xlu0 %v25, 92
  %v969 = vpop.permute.xlu0 %968
  %vm970 = vcmp.lt.s32.totalorder %v42, 92
  %v971 = vsel %vm970, %v967, %v969
  %v972 = vsel %vm970, %v965, %v967
  %v973 = vsel %vm970, %v969, %v965
  %v975 = vsel %vm47, %v32, 0
  %977 = vmatprep.subr.mxu0 %v971
  %978 = vmatpush1.msra.mxu0 %v972
  %979 = vmatprep.subr.mxu0 0.0
  %980 = vmatpush1.msra.mxu0 0.0
  %981 = vmatprep.subr.mxu0 0.0
  %982 = vmatpush1.msra.mxu0 0.0
  %983 = vmatprep.subr.mxu0 0.0
  %984 = vmatpush1.msra.mxu0 0.0
  %985 = vmatprep.subr.mxu0 0.0
  %986 = vmatpush1.msra.mxu0 0.0
  %987 = vmatprep.subr.mxu0 0.0
  %988 = vmatpush1.msra.mxu0 0.0
  %989 = vmatprep.subr.mxu0 0.0
  %990 = vmatpush1.msra.mxu0 0.0
  %991 = vmatprep.subr.mxu0 0.0
  %992 = vmatpush1.msra.mxu0 0.0
  %993 = vmatprep.subr.mxu0 0.0
  %994 = vmatpush1.msra.mxu0 0.0
  %995 = vmatprep.subr.mxu0 0.0
  %996 = vmatpush1.msra.mxu0 0.0
  %997 = vmatprep.subr.mxu0 0.0
  %998 = vmatpush1.msra.mxu0 0.0
  %999 = vmatprep.subr.mxu0 0.0
  %1000 = vmatpush1.msra.mxu0 0.0
  %1001 = vmatprep.subr.mxu0 0.0
  %1002 = vmatpush1.msra.mxu0 0.0
  %1003 = vmatprep.subr.mxu0 0.0
  %1004 = vmatpush1.msra.mxu0 0.0
  %1005 = vmatprep.subr.mxu0 0.0
  %1006 = vmatpush1.msra.mxu0 0.0
  %1007 = vmatprep.subr.mxu0 0.0
  %1008 = vmatpush1.msra.mxu0 0.0
  %1009 = vmatprep.subr.mxu0 0.0
  %1010 = vmatpush1.msra.mxu0 0.0
  %1011 = vmatprep.subr.mxu0 0.0
  %1012 = vmatpush1.msra.mxu0 0.0
  %1013 = vmatprep.subr.mxu0 0.0
  %1014 = vmatpush1.msra.mxu0 0.0
  %1015 = vmatprep.subr.mxu0 0.0
  %1016 = vmatpush1.msra.mxu0 0.0
  %1017 = vmatprep.subr.mxu0 0.0
  %1018 = vmatpush1.msra.mxu0 0.0
  %1019 = vmatprep.subr.mxu0 0.0
  %1020 = vmatpush1.msra.mxu0 0.0
  %1021 = vmatprep.subr.mxu0 0.0
  %1022 = vmatpush1.msra.mxu0 0.0
  %1023 = vmatprep.subr.mxu0 0.0
  %1024 = vmatpush1.msra.mxu0 0.0
  %1025 = vmatprep.subr.mxu0 0.0
  %1026 = vmatpush1.msra.mxu0 0.0
  %1027 = vmatprep.subr.mxu0 0.0
  %1028 = vmatpush1.msra.mxu0 0.0
  %1029 = vmatprep.subr.mxu0 0.0
  %1030 = vmatpush1.msra.mxu0 0.0
  %1031 = vmatprep.subr.mxu0 0.0
  %1032 = vmatpush1.msra.mxu0 0.0
  %1033 = vmatprep.subr.mxu0 0.0
  %1034 = vmatpush1.msra.mxu0 0.0
  %1035 = vmatprep.subr.mxu0 0.0
  %1036 = vmatpush1.msra.mxu0 0.0
  %1037 = vmatprep.subr.mxu0 0.0
  %1038 = vmatpush1.msra.mxu0 0.0
  %1039 = vmatprep.subr.mxu0 0.0
  %1040 = vmatpush1.msra.mxu0 0.0
  %1041 = vmatprep.mubr.f32.mxu0 0.0
  %1042 = vmatmul.mubr.f32.gmra.mrb[0].mxu0 %v975
  %v1043 = vpop.f32.mrb[0].mxu0
  %v1044 = vadd.f32 0.0, %v1043
  %v1045 = vpop.f32.mrb[0].mxu0
  %v1046 = vadd.f32 0.0, %v1045
  %1047 = vdwg.mxu0
  %1048 = vmatprep.subr.mxu0 0.0
  %1049 = vmatpush1.msra.mxu0 %v973
  %1050 = vmatprep.subr.mxu0 0.0
  %1051 = vmatpush1.msra.mxu0 0.0
  %1052 = vmatprep.subr.mxu0 0.0
  %1053 = vmatpush1.msra.mxu0 0.0
  %1054 = vmatprep.subr.mxu0 0.0
  %1055 = vmatpush1.msra.mxu0 0.0
  %1056 = vmatprep.subr.mxu0 0.0
  %1057 = vmatpush1.msra.mxu0 0.0
  %1058 = vmatprep.subr.mxu0 0.0
  %1059 = vmatpush1.msra.mxu0 0.0
  %1060 = vmatprep.subr.mxu0 0.0
  %1061 = vmatpush1.msra.mxu0 0.0
  %1062 = vmatprep.subr.mxu0 0.0
  %1063 = vmatpush1.msra.mxu0 0.0
  %1064 = vmatprep.subr.mxu0 0.0
  %1065 = vmatpush1.msra.mxu0 0.0
  %1066 = vmatprep.subr.mxu0 0.0
  %1067 = vmatpush1.msra.mxu0 0.0
  %1068 = vmatprep.subr.mxu0 0.0
  %1069 = vmatpush1.msra.mxu0 0.0
  %1070 = vmatprep.subr.mxu0 0.0
  %1071 = vmatpush1.msra.mxu0 0.0
  %1072 = vmatprep.subr.mxu0 0.0
  %1073 = vmatpush1.msra.mxu0 0.0
  %1074 = vmatprep.subr.mxu0 0.0
  %1075 = vmatpush1.msra.mxu0 0.0
  %1076 = vmatprep.subr.mxu0 0.0
  %1077 = vmatpush1.msra.mxu0 0.0
  %1078 = vmatprep.subr.mxu0 0.0
  %1079 = vmatpush1.msra.mxu0 0.0
  %1080 = vmatprep.subr.mxu0 0.0
  %1081 = vmatpush1.msra.mxu0 0.0
  %1082 = vmatprep.subr.mxu0 0.0
  %1083 = vmatpush1.msra.mxu0 0.0
  %1084 = vmatprep.subr.mxu0 0.0
  %1085 = vmatpush1.msra.mxu0 0.0
  %1086 = vmatprep.subr.mxu0 0.0
  %1087 = vmatpush1.msra.mxu0 0.0
  %1088 = vmatprep.subr.mxu0 0.0
  %1089 = vmatpush1.msra.mxu0 0.0
  %1090 = vmatprep.subr.mxu0 0.0
  %1091 = vmatpush1.msra.mxu0 0.0
  %1092 = vmatprep.subr.mxu0 0.0
  %1093 = vmatpush1.msra.mxu0 0.0
  %1094 = vmatprep.subr.mxu0 0.0
  %1095 = vmatpush1.msra.mxu0 0.0
  %1096 = vmatprep.subr.mxu0 0.0
  %1097 = vmatpush1.msra.mxu0 0.0
  %1098 = vmatprep.subr.mxu0 0.0
  %1099 = vmatpush1.msra.mxu0 0.0
  %1100 = vmatprep.subr.mxu0 0.0
  %1101 = vmatpush1.msra.mxu0 0.0
  %1102 = vmatprep.subr.mxu0 0.0
  %1103 = vmatpush1.msra.mxu0 0.0
  %1104 = vmatprep.subr.mxu0 0.0
  %1105 = vmatpush1.msra.mxu0 0.0
  %1106 = vmatprep.subr.mxu0 0.0
  %1107 = vmatpush1.msra.mxu0 0.0
  %1108 = vmatprep.subr.mxu0 0.0
  %1109 = vmatpush1.msra.mxu0 0.0
  %1110 = vmatprep.subr.mxu0 0.0
  %1111 = vmatpush1.msra.mxu0 0.0
  %1112 = vmatprep.mubr.f32.mxu0 0.0
  %1113 = vmatmul.mubr.f32.gmra.mrb[0].mxu0 %v975
  %v1114 = vpop.f32.mrb[0].mxu0
  %v1115 = vadd.f32 0.0, %v1114
  %v1116 = vpop.f32.mrb[0].mxu0
  %1117 = vdwg.mxu0
  %v1118 = vadd.f32 %v961, %v1044
  %v1119 = vadd.f32 %v962, %v1046
  %v1120 = vadd.f32 %v963, %v1115
  %1121 = vrot.lane.b32.xlu0 %v23, 91
  %v1122 = vpop.permute.xlu0 %1121
  %1123 = vrot.lane.b32.xlu0 %v24, 91
  %v1124 = vpop.permute.xlu0 %1123
  %1125 = vrot.lane.b32.xlu0 %v25, 91
  %v1126 = vpop.permute.xlu0 %1125
  %vm1127 = vcmp.lt.s32.totalorder %v42, 91
  %v1128 = vsel %vm1127, %v1124, %v1126
  %v1129 = vsel %vm1127, %v1122, %v1124
  %v1130 = vsel %vm1127, %v1126, %v1122
  %v1132 = vsel %vm47, %v33, 0
  %1134 = vmatprep.subr.mxu0 %v1128
  %1135 = vmatpush1.msra.mxu0 %v1129
  %1136 = vmatprep.subr.mxu0 0.0
  %1137 = vmatpush1.msra.mxu0 0.0
  %1138 = vmatprep.subr.mxu0 0.0
  %1139 = vmatpush1.msra.mxu0 0.0
  %1140 = vmatprep.subr.mxu0 0.0
  %1141 = vmatpush1.msra.mxu0 0.0
  %1142 = vmatprep.subr.mxu0 0.0
  %1143 = vmatpush1.msra.mxu0 0.0
  %1144 = vmatprep.subr.mxu0 0.0
  %1145 = vmatpush1.msra.mxu0 0.0
  %1146 = vmatprep.subr.mxu0 0.0
  %1147 = vmatpush1.msra.mxu0 0.0
  %1148 = vmatprep.subr.mxu0 0.0
  %1149 = vmatpush1.msra.mxu0 0.0
  %1150 = vmatprep.subr.mxu0 0.0
  %1151 = vmatpush1.msra.mxu0 0.0
  %1152 = vmatprep.subr.mxu0 0.0
  %1153 = vmatpush1.msra.mxu0 0.0
  %1154 = vmatprep.subr.mxu0 0.0
  %1155 = vmatpush1.msra.mxu0 0.0
  %1156 = vmatprep.subr.mxu0 0.0
  %1157 = vmatpush1.msra.mxu0 0.0
  %1158 = vmatprep.subr.mxu0 0.0
  %1159 = vmatpush1.msra.mxu0 0.0
  %1160 = vmatprep.subr.mxu0 0.0
  %1161 = vmatpush1.msra.mxu0 0.0
  %1162 = vmatprep.subr.mxu0 0.0
  %1163 = vmatpush1.msra.mxu0 0.0
  %1164 = vmatprep.subr.mxu0 0.0
  %1165 = vmatpush1.msra.mxu0 0.0
  %1166 = vmatprep.subr.mxu0 0.0
  %1167 = vmatpush1.msra.mxu0 0.0
  %1168 = vmatprep.subr.mxu0 0.0
  %1169 = vmatpush1.msra.mxu0 0.0
  %1170 = vmatprep.subr.mxu0 0.0
  %1171 = vmatpush1.msra.mxu0 0.0
  %1172 = vmatprep.subr.mxu0 0.0
  %1173 = vmatpush1.msra.mxu0 0.0
  %1174 = vmatprep.subr.mxu0 0.0
  %1175 = vmatpush1.msra.mxu0 0.0
  %1176 = vmatprep.subr.mxu0 0.0
  %1177 = vmatpush1.msra.mxu0 0.0
  %1178 = vmatprep.subr.mxu0 0.0
  %1179 = vmatpush1.msra.mxu0 0.0
  %1180 = vmatprep.subr.mxu0 0.0
  %1181 = vmatpush1.msra.mxu0 0.0
  %1182 = vmatprep.subr.mxu0 0.0
  %1183 = vmatpush1.msra.mxu0 0.0
  %1184 = vmatprep.subr.mxu0 0.0
  %1185 = vmatpush1.msra.mxu0 0.0
  %1186 = vmatprep.subr.mxu0 0.0
  %1187 = vmatpush1.msra.mxu0 0.0
  %1188 = vmatprep.subr.mxu0 0.0
  %1189 = vmatpush1.msra.mxu0 0.0
  %1190 = vmatprep.subr.mxu0 0.0
  %1191 = vmatpush1.msra.mxu0 0.0
  %1192 = vmatprep.subr.mxu0 0.0
  %1193 = vmatpush1.msra.mxu0 0.0
  %1194 = vmatprep.subr.mxu0 0.0
  %1195 = vmatpush1.msra.mxu0 0.0
  %1196 = vmatprep.subr.mxu0 0.0
  %1197 = vmatpush1.msra.mxu0 0.0
  %1198 = vmatprep.mubr.f32.mxu0 0.0
  %1199 = vmatmul.mubr.f32.gmra.mrb[0].mxu0 %v1132
  %v1200 = vpop.f32.mrb[0].mxu0
  %v1201 = vadd.f32 0.0, %v1200
  %v1202 = vpop.f32.mrb[0].mxu0
  %v1203 = vadd.f32 0.0, %v1202
  %1204 = vdwg.mxu0
  %1205 = vmatprep.subr.mxu0 0.0
  %1206 = vmatpush1.msra.mxu0 %v1130
  %1207 = vmatprep.subr.mxu0 0.0
  %1208 = vmatpush1.msra.mxu0 0.0
  %1209 = vmatprep.subr.mxu0 0.0
  %1210 = vmatpush1.msra.mxu0 0.0
  %1211 = vmatprep.subr.mxu0 0.0
  %1212 = vmatpush1.msra.mxu0 0.0
  %1213 = vmatprep.subr.mxu0 0.0
  %1214 = vmatpush1.msra.mxu0 0.0
  %1215 = vmatprep.subr.mxu0 0.0
  %1216 = vmatpush1.msra.mxu0 0.0
  %1217 = vmatprep.subr.mxu0 0.0
  %1218 = vmatpush1.msra.mxu0 0.0
  %1219 = vmatprep.subr.mxu0 0.0
  %1220 = vmatpush1.msra.mxu0 0.0
  %1221 = vmatprep.subr.mxu0 0.0
  %1222 = vmatpush1.msra.mxu0 0.0
  %1223 = vmatprep.subr.mxu0 0.0
  %1224 = vmatpush1.msra.mxu0 0.0
  %1225 = vmatprep.subr.mxu0 0.0
  %1226 = vmatpush1.msra.mxu0 0.0
  %1227 = vmatprep.subr.mxu0 0.0
  %1228 = vmatpush1.msra.mxu0 0.0
  %1229 = vmatprep.subr.mxu0 0.0
  %1230 = vmatpush1.msra.mxu0 0.0
  %1231 = vmatprep.subr.mxu0 0.0
  %1232 = vmatpush1.msra.mxu0 0.0
  %1233 = vmatprep.subr.mxu0 0.0
  %1234 = vmatpush1.msra.mxu0 0.0
  %1235 = vmatprep.subr.mxu0 0.0
  %1236 = vmatpush1.msra.mxu0 0.0
  %1237 = vmatprep.subr.mxu0 0.0
  %1238 = vmatpush1.msra.mxu0 0.0
  %1239 = vmatprep.subr.mxu0 0.0
  %1240 = vmatpush1.msra.mxu0 0.0
  %1241 = vmatprep.subr.mxu0 0.0
  %1242 = vmatpush1.msra.mxu0 0.0
  %1243 = vmatprep.subr.mxu0 0.0
  %1244 = vmatpush1.msra.mxu0 0.0
  %1245 = vmatprep.subr.mxu0 0.0
  %1246 = vmatpush1.msra.mxu0 0.0
  %1247 = vmatprep.subr.mxu0 0.0
  %1248 = vmatpush1.msra.mxu0 0.0
  %1249 = vmatprep.subr.mxu0 0.0
  %1250 = vmatpush1.msra.mxu0 0.0
  %1251 = vmatprep.subr.mxu0 0.0
  %1252 = vmatpush1.msra.mxu0 0.0
  %1253 = vmatprep.subr.mxu0 0.0
  %1254 = vmatpush1.msra.mxu0 0.0
  %1255 = vmatprep.subr.mxu0 0.0
  %1256 = vmatpush1.msra.mxu0 0.0
  %1257 = vmatprep.subr.mxu0 0.0
  %1258 = vmatpush1.msra.mxu0 0.0
  %1259 = vmatprep.subr.mxu0 0.0
  %1260 = vmatpush1.msra.mxu0 0.0
  %1261 = vmatprep.subr.mxu0 0.0
  %1262 = vmatpush1.msra.mxu0 0.0
  %1263 = vmatprep.subr.mxu0 0.0
  %1264 = vmatpush1.msra.mxu0 0.0
  %1265 = vmatprep.subr.mxu0 0.0
  %1266 = vmatpush1.msra.mxu0 0.0
  %1267 = vmatprep.subr.mxu0 0.0
  %1268 = vmatpush1.msra.mxu0 0.0
  %1269 = vmatprep.mubr.f32.mxu0 0.0
  %1270 = vmatmul.mubr.f32.gmra.mrb[0].mxu0 %v1132
  %v1271 = vpop.f32.mrb[0].mxu0
  %v1272 = vadd.f32 0.0, %v1271
  %v1273 = vpop.f32.mrb[0].mxu0
  %1274 = vdwg.mxu0
  %v1275 = vadd.f32 %v1118, %v1201
  %v1276 = vadd.f32 %v1119, %v1203
  %v1277 = vadd.f32 %v1120, %v1272
  %1278 = vrot.lane.b32.xlu0 %v23, 90
  %v1279 = vpop.permute.xlu0 %1278
  %1280 = vrot.lane.b32.xlu0 %v24, 90
  %v1281 = vpop.permute.xlu0 %1280
  %1282 = vrot.lane.b32.xlu0 %v25, 90
  %v1283 = vpop.permute.xlu0 %1282
  %vm1284 = vcmp.lt.s32.totalorder %v42, 90
  %v1285 = vsel %vm1284, %v1281, %v1283
  %v1286 = vsel %vm1284, %v1279, %v1281
  %v1287 = vsel %vm1284, %v1283, %v1279
  %v1289 = vsel %vm47, %v34, 0
  %1291 = vmatprep.subr.mxu0 %v1285
  %1292 = vmatpush1.msra.mxu0 %v1286
  %1293 = vmatprep.subr.mxu0 0.0
  %1294 = vmatpush1.msra.mxu0 0.0
  %1295 = vmatprep.subr.mxu0 0.0
  %1296 = vmatpush1.msra.mxu0 0.0
  %1297 = vmatprep.subr.mxu0 0.0
  %1298 = vmatpush1.msra.mxu0 0.0
  %1299 = vmatprep.subr.mxu0 0.0
  %1300 = vmatpush1.msra.mxu0 0.0
  %1301 = vmatprep.subr.mxu0 0.0
  %1302 = vmatpush1.msra.mxu0 0.0
  %1303 = vmatprep.subr.mxu0 0.0
  %1304 = vmatpush1.msra.mxu0 0.0
  %1305 = vmatprep.subr.mxu0 0.0
  %1306 = vmatpush1.msra.mxu0 0.0
  %1307 = vmatprep.subr.mxu0 0.0
  %1308 = vmatpush1.msra.mxu0 0.0
  %1309 = vmatprep.subr.mxu0 0.0
  %1310 = vmatpush1.msra.mxu0 0.0
  %1311 = vmatprep.subr.mxu0 0.0
  %1312 = vmatpush1.msra.mxu0 0.0
  %1313 = vmatprep.subr.mxu0 0.0
  %1314 = vmatpush1.msra.mxu0 0.0
  %1315 = vmatprep.subr.mxu0 0.0
  %1316 = vmatpush1.msra.mxu0 0.0
  %1317 = vmatprep.subr.mxu0 0.0
  %1318 = vmatpush1.msra.mxu0 0.0
  %1319 = vmatprep.subr.mxu0 0.0
  %1320 = vmatpush1.msra.mxu0 0.0
  %1321 = vmatprep.subr.mxu0 0.0
  %1322 = vmatpush1.msra.mxu0 0.0
  %1323 = vmatprep.subr.mxu0 0.0
  %1324 = vmatpush1.msra.mxu0 0.0
  %1325 = vmatprep.subr.mxu0 0.0
  %1326 = vmatpush1.msra.mxu0 0.0
  %1327 = vmatprep.subr.mxu0 0.0
  %1328 = vmatpush1.msra.mxu0 0.0
  %1329 = vmatprep.subr.mxu0 0.0
  %1330 = vmatpush1.msra.mxu0 0.0
  %1331 = vmatprep.subr.mxu0 0.0
  %1332 = vmatpush1.msra.mxu0 0.0
  %1333 = vmatprep.subr.mxu0 0.0
  %1334 = vmatpush1.msra.mxu0 0.0
  %1335 = vmatprep.subr.mxu0 0.0
  %1336 = vmatpush1.msra.mxu0 0.0
  %1337 = vmatprep.subr.mxu0 0.0
  %1338 = vmatpush1.msra.mxu0 0.0
  %1339 = vmatprep.subr.mxu0 0.0
  %1340 = vmatpush1.msra.mxu0 0.0
  %1341 = vmatprep.subr.mxu0 0.0
  %1342 = vmatpush1.msra.mxu0 0.0
  %1343 = vmatprep.subr.mxu0 0.0
  %1344 = vmatpush1.msra.mxu0 0.0
  %1345 = vmatprep.subr.mxu0 0.0
  %1346 = vmatpush1.msra.mxu0 0.0
  %1347 = vmatprep.subr.mxu0 0.0
  %1348 = vmatpush1.msra.mxu0 0.0
  %1349 = vmatprep.subr.mxu0 0.0
  %1350 = vmatpush1.msra.mxu0 0.0
  %1351 = vmatprep.subr.mxu0 0.0
  %1352 = vmatpush1.msra.mxu0 0.0
  %1353 = vmatprep.subr.mxu0 0.0
  %1354 = vmatpush1.msra.mxu0 0.0
  %1355 = vmatprep.mubr.f32.mxu0 0.0
  %1356 = vmatmul.mubr.f32.gmra.mrb[0].mxu0 %v1289
  %v1357 = vpop.f32.mrb[0].mxu0
  %v1358 = vadd.f32 0.0, %v1357
  %v1359 = vpop.f32.mrb[0].mxu0
  %v1360 = vadd.f32 0.0, %v1359
  %1361 = vdwg.mxu0
  %1362 = vmatprep.subr.mxu0 0.0
  %1363 = vmatpush1.msra.mxu0 %v1287
  %1364 = vmatprep.subr.mxu0 0.0
  %1365 = vmatpush1.msra.mxu0 0.0
  %1366 = vmatprep.subr.mxu0 0.0
  %1367 = vmatpush1.msra.mxu0 0.0
  %1368 = vmatprep.subr.mxu0 0.0
  %1369 = vmatpush1.msra.mxu0 0.0
  %1370 = vmatprep.subr.mxu0 0.0
  %1371 = vmatpush1.msra.mxu0 0.0
  %1372 = vmatprep.subr.mxu0 0.0
  %1373 = vmatpush1.msra.mxu0 0.0
  %1374 = vmatprep.subr.mxu0 0.0
  %1375 = vmatpush1.msra.mxu0 0.0
  %1376 = vmatprep.subr.mxu0 0.0
  %1377 = vmatpush1.msra.mxu0 0.0
  %1378 = vmatprep.subr.mxu0 0.0
  %1379 = vmatpush1.msra.mxu0 0.0
  %1380 = vmatprep.subr.mxu0 0.0
  %1381 = vmatpush1.msra.mxu0 0.0
  %1382 = vmatprep.subr.mxu0 0.0
  %1383 = vmatpush1.msra.mxu0 0.0
  %1384 = vmatprep.subr.mxu0 0.0
  %1385 = vmatpush1.msra.mxu0 0.0
  %1386 = vmatprep.subr.mxu0 0.0
  %1387 = vmatpush1.msra.mxu0 0.0
  %1388 = vmatprep.subr.mxu0 0.0
  %1389 = vmatpush1.msra.mxu0 0.0
  %1390 = vmatprep.subr.mxu0 0.0
  %1391 = vmatpush1.msra.mxu0 0.0
  %1392 = vmatprep.subr.mxu0 0.0
  %1393 = vmatpush1.msra.mxu0 0.0
  %1394 = vmatprep.subr.mxu0 0.0
  %1395 = vmatpush1.msra.mxu0 0.0
  %1396 = vmatprep.subr.mxu0 0.0
  %1397 = vmatpush1.msra.mxu0 0.0
  %1398 = vmatprep.subr.mxu0 0.0
  %1399 = vmatpush1.msra.mxu0 0.0
  %1400 = vmatprep.subr.mxu0 0.0
  %1401 = vmatpush1.msra.mxu0 0.0
  %1402 = vmatprep.subr.mxu0 0.0
  %1403 = vmatpush1.msra.mxu0 0.0
  %1404 = vmatprep.subr.mxu0 0.0
  %1405 = vmatpush1.msra.mxu0 0.0
  %1406 = vmatprep.subr.mxu0 0.0
  %1407 = vmatpush1.msra.mxu0 0.0
  %1408 = vmatprep.subr.mxu0 0.0
  %1409 = vmatpush1.msra.mxu0 0.0
  %1410 = vmatprep.subr.mxu0 0.0
  %1411 = vmatpush1.msra.mxu0 0.0
  %1412 = vmatprep.subr.mxu0 0.0
  %1413 = vmatpush1.msra.mxu0 0.0
  %1414 = vmatprep.subr.mxu0 0.0
  %1415 = vmatpush1.msra.mxu0 0.0
  %1416 = vmatprep.subr.mxu0 0.0
  %1417 = vmatpush1.msra.mxu0 0.0
  %1418 = vmatprep.subr.mxu0 0.0
  %1419 = vmatpush1.msra.mxu0 0.0
  %1420 = vmatprep.subr.mxu0 0.0
  %1421 = vmatpush1.msra.mxu0 0.0
  %1422 = vmatprep.subr.mxu0 0.0
  %1423 = vmatpush1.msra.mxu0 0.0
  %1424 = vmatprep.subr.mxu0 0.0
  %1425 = vmatpush1.msra.mxu0 0.0
  %1426 = vmatprep.mubr.f32.mxu0 0.0
  %1427 = vmatmul.mubr.f32.gmra.mrb[0].mxu0 %v1289
  %v1428 = vpop.f32.mrb[0].mxu0
  %v1429 = vadd.f32 0.0, %v1428
  %v1430 = vpop.f32.mrb[0].mxu0
  %1431 = vdwg.mxu0
  %v1432 = vadd.f32 %v1275, %v1358
  %v1433 = vadd.f32 %v1276, %v1360
  %v1434 = vadd.f32 %v1277, %v1429
  %v1435 = vld [vmem:[%s2] sm:$0xff]
  %1437 = vset.pattern.permute.xlu0 0
  %1438 = vperm.xlu0 %1437, %v1435
  %v1439 = vpop.permute.xlu0 %1438
  %v1441 = vadd.f32 %v1432, %v1439
  %v1442 = vadd.f32 %v1433, %v1439
  %v1443 = vadd.f32 %v1434, %v1439
  %v1444 = vmul.f32 %v1441, 0.01
  %v1445 = vmul.f32 %v1442, 0.01
  %v1446 = vmul.f32 %v1443, 0.01
  %v1447 = vmax.f32 %v1441, %v1444
  %v1448 = vmax.f32 %v1442, %v1445
  %v1449 = vmax.f32 %v1443, %v1446
  %v1450 = vld [vmem:[%s3] sm:$0xff]
  %v1451 = vld [vmem:[%s3 + $0x8] sm:$0xff]
  %v1452 = vld [vmem:[%s3 + $0x10] sm:$0xff]
  %v1453 = vld [vmem:[%s3 + $0x18] sm:$0xff]
  %v1454 = vld [vmem:[%s3 + $0x20] sm:$0xff]
  %v1455 = vld [vmem:[%s3 + $0x28] sm:$0xff]
  %v1456 = vld [vmem:[%s3 + $0x30] sm:$0xff]
  %v1457 = vld [vmem:[%s3 + $0x38] sm:$0xff]
  %v1458 = vld [vmem:[%s3 + $0x40] sm:$0xff]
  %v1459 = vld [vmem:[%s3 + $0x48] sm:$0xff]
  %v1460 = vld [vmem:[%s3 + $0x50] sm:$0xff]
  %v1461 = vld [vmem:[%s3 + $0x58] sm:$0xff]
  %v1462 = vld [vmem:[%s3 + $0x60] sm:$0xff]
  %v1463 = vld [vmem:[%s3 + $0x68] sm:$0xff]
  %v1464 = vld [vmem:[%s3 + $0x70] sm:$0xff]
  %v1465 = vld [vmem:[%s3 + $0x78] sm:$0xff]
  %v1466 = vld [vmem:[%s3 + $0x80] sm:$0xff]
  %v1467 = vld [vmem:[%s3 + $0x88] sm:$0xff]
  %v1468 = vld [vmem:[%s3 + $0x90] sm:$0xff]
  %v1469 = vld [vmem:[%s3 + $0x98] sm:$0xff]
  %v1470 = vld [vmem:[%s3 + $0xa0] sm:$0xff]
  %v1471 = vld [vmem:[%s3 + $0xa8] sm:$0xff]
  %v1472 = vld [vmem:[%s3 + $0xb0] sm:$0xff]
  %v1473 = vld [vmem:[%s3 + $0xb8] sm:$0xff]
  %v1474 = vld [vmem:[%s3 + $0xc0] sm:$0xff]
  %v1475 = vld [vmem:[%s3 + $0xc8] sm:$0xff]
  %v1476 = vld [vmem:[%s3 + $0xd0] sm:$0xff]
  %v1477 = vld [vmem:[%s3 + $0xd8] sm:$0xff]
  %v1478 = vld [vmem:[%s3 + $0xe0] sm:$0xff]
  %v1479 = vld [vmem:[%s3 + $0xe8] sm:$0xff]
  %v1480 = vld [vmem:[%s3 + $0xf0] sm:$0xff]
  %v1481 = vld [vmem:[%s3 + $0xf8] sm:$0xff]
  %v1482 = vld [vmem:[%s3 + $0x100] sm:$0xff]
  %v1483 = vld [vmem:[%s3 + $0x108] sm:$0xff]
  %v1484 = vld [vmem:[%s3 + $0x110] sm:$0xff]
  %v1485 = vld [vmem:[%s3 + $0x118] sm:$0xff]
  %v1486 = vld [vmem:[%s3 + $0x120] sm:$0xff]
  %v1487 = vld [vmem:[%s3 + $0x128] sm:$0xff]
  %v1488 = vld [vmem:[%s3 + $0x130] sm:$0xff]
  %v1489 = vld [vmem:[%s3 + $0x138] sm:$0xff]
  %v1490 = vld [vmem:[%s3 + $0x140] sm:$0xff]
  %v1491 = vld [vmem:[%s3 + $0x148] sm:$0xff]
  %v1492 = vld [vmem:[%s3 + $0x150] sm:$0xff]
  %v1493 = vld [vmem:[%s3 + $0x158] sm:$0xff]
  %v1494 = vld [vmem:[%s3 + $0x160] sm:$0xff]
  %v1495 = vld [vmem:[%s3 + $0x168] sm:$0xff]
  %v1496 = vld [vmem:[%s3 + $0x170] sm:$0xff]
  %v1497 = vld [vmem:[%s3 + $0x178] sm:$0xff]
  %1498 = vmatprep.subr.mxu0 0.0
  %1499 = vmatpush1.msra.mxu0 %v1450
  %1500 = vmatprep.subr.mxu0 0.0
  %1501 = vmatpush1.msra.mxu0 %v1451
  %1502 = vmatprep.subr.mxu0 0.0
  %1503 = vmatpush1.msra.mxu0 %v1452
  %1504 = vmatprep.subr.mxu0 0.0
  %1505 = vmatpush1.msra.mxu0 %v1453
  %1506 = vmatprep.subr.mxu0 0.0
  %1507 = vmatpush1.msra.mxu0 %v1454
  %1508 = vmatprep.subr.mxu0 0.0
  %1509 = vmatpush1.msra.mxu0 %v1455
  %1510 = vmatprep.subr.mxu0 0.0
  %1511 = vmatpush1.msra.mxu0 %v1456
  %1512 = vmatprep.subr.mxu0 0.0
  %1513 = vmatpush1.msra.mxu0 %v1457
  %1514 = vmatprep.subr.mxu0 0.0
  %1515 = vmatpush1.msra.mxu0 %v1458
  %1516 = vmatprep.subr.mxu0 0.0
  %1517 = vmatpush1.msra.mxu0 %v1459
  %1518 = vmatprep.subr.mxu0 0.0
  %1519 = vmatpush1.msra.mxu0 %v1460
  %1520 = vmatprep.subr.mxu0 0.0
  %1521 = vmatpush1.msra.mxu0 %v1461
  %1522 = vmatprep.subr.mxu0 0.0
  %1523 = vmatpush1.msra.mxu0 %v1462
  %1524 = vmatprep.subr.mxu0 0.0
  %1525 = vmatpush1.msra.mxu0 %v1463
  %1526 = vmatprep.subr.mxu0 0.0
  %1527 = vmatpush1.msra.mxu0 %v1464
  %1528 = vmatprep.subr.mxu0 0.0
  %1529 = vmatpush1.msra.mxu0 %v1465
  %1530 = vmatprep.subr.mxu0 0.0
  %1531 = vmatpush1.msra.mxu0 %v1466
  %1532 = vmatprep.subr.mxu0 0.0
  %1533 = vmatpush1.msra.mxu0 %v1467
  %1534 = vmatprep.subr.mxu0 0.0
  %1535 = vmatpush1.msra.mxu0 %v1468
  %1536 = vmatprep.subr.mxu0 0.0
  %1537 = vmatpush1.msra.mxu0 %v1469
  %1538 = vmatprep.subr.mxu0 0.0
  %1539 = vmatpush1.msra.mxu0 %v1470
  %1540 = vmatprep.subr.mxu0 0.0
  %1541 = vmatpush1.msra.mxu0 %v1471
  %1542 = vmatprep.subr.mxu0 0.0
  %1543 = vmatpush1.msra.mxu0 %v1472
  %1544 = vmatprep.subr.mxu0 0.0
  %1545 = vmatpush1.msra.mxu0 %v1473
  %1546 = vmatprep.subr.mxu0 0.0
  %1547 = vmatpush1.msra.mxu0 %v1474
  %1548 = vmatprep.subr.mxu0 0.0
  %1549 = vmatpush1.msra.mxu0 %v1475
  %1550 = vmatprep.subr.mxu0 0.0
  %1551 = vmatpush1.msra.mxu0 %v1476
  %1552 = vmatprep.subr.mxu0 0.0
  %1553 = vmatpush1.msra.mxu0 %v1477
  %1554 = vmatprep.subr.mxu0 0.0
  %1555 = vmatpush1.msra.mxu0 %v1478
  %1556 = vmatprep.subr.mxu0 0.0
  %1557 = vmatpush1.msra.mxu0 %v1479
  %1558 = vmatprep.subr.mxu0 0.0
  %1559 = vmatpush1.msra.mxu0 %v1480
  %1560 = vmatprep.subr.mxu0 0.0
  %1561 = vmatpush1.msra.mxu0 %v1481
  %1562 = vmatprep.mubr.f32.mxu0 %v1448
  %1563 = vmatmul.mubr.f32.gmra.mrb[0].mxu0 %v1447
  %v1564 = vpop.f32.mrb[0].mxu0
  %v1565 = vadd.f32 0.0, %v1564
  %v1566 = vpop.f32.mrb[0].mxu0
  %1567 = vdwg.mxu0
  %1568 = vmatprep.subr.mxu0 0.0
  %1569 = vmatpush1.msra.mxu0 %v1482
  %1570 = vmatprep.subr.mxu0 0.0
  %1571 = vmatpush1.msra.mxu0 %v1483
  %1572 = vmatprep.subr.mxu0 0.0
  %1573 = vmatpush1.msra.mxu0 %v1484
  %1574 = vmatprep.subr.mxu0 0.0
  %1575 = vmatpush1.msra.mxu0 %v1485
  %1576 = vmatprep.subr.mxu0 0.0
  %1577 = vmatpush1.msra.mxu0 %v1486
  %1578 = vmatprep.subr.mxu0 0.0
  %1579 = vmatpush1.msra.mxu0 %v1487
  %1580 = vmatprep.subr.mxu0 0.0
  %1581 = vmatpush1.msra.mxu0 %v1488
  %1582 = vmatprep.subr.mxu0 0.0
  %1583 = vmatpush1.msra.mxu0 %v1489
  %1584 = vmatprep.subr.mxu0 0.0
  %1585 = vmatpush1.msra.mxu0 %v1490
  %1586 = vmatprep.subr.mxu0 0.0
  %1587 = vmatpush1.msra.mxu0 %v1491
  %1588 = vmatprep.subr.mxu0 0.0
  %1589 = vmatpush1.msra.mxu0 %v1492
  %1590 = vmatprep.subr.mxu0 0.0
  %1591 = vmatpush1.msra.mxu0 %v1493
  %1592 = vmatprep.subr.mxu0 0.0
  %1593 = vmatpush1.msra.mxu0 %v1494
  %1594 = vmatprep.subr.mxu0 0.0
  %1595 = vmatpush1.msra.mxu0 %v1495
  %1596 = vmatprep.subr.mxu0 0.0
  %1597 = vmatpush1.msra.mxu0 %v1496
  %1598 = vmatprep.subr.mxu0 0.0
  %1599 = vmatpush1.msra.mxu0 %v1497
  %1600 = vmatprep.subr.mxu0 0.0
  %1601 = vmatpush1.msra.mxu0 0.0
  %1602 = vmatprep.subr.mxu0 0.0
  %1603 = vmatpush1.msra.mxu0 0.0
  %1604 = vmatprep.subr.mxu0 0.0
  %1605 = vmatpush1.msra.mxu0 0.0
  %1606 = vmatprep.subr.mxu0 0.0
  %1607 = vmatpush1.msra.mxu0 0.0
  %1608 = vmatprep.subr.mxu0 0.0
  %1609 = vmatpush1.msra.mxu0 0.0
  %1610 = vmatprep.subr.mxu0 0.0
  %1611 = vmatpush1.msra.mxu0 0.0
  %1612 = vmatprep.subr.mxu0 0.0
  %1613 = vmatpush1.msra.mxu0 0.0
  %1614 = vmatprep.subr.mxu0 0.0
  %1615 = vmatpush1.msra.mxu0 0.0
  %1616 = vmatprep.subr.mxu0 0.0
  %1617 = vmatpush1.msra.mxu0 0.0
  %1618 = vmatprep.subr.mxu0 0.0
  %1619 = vmatpush1.msra.mxu0 0.0
  %1620 = vmatprep.subr.mxu0 0.0
  %1621 = vmatpush1.msra.mxu0 0.0
  %1622 = vmatprep.subr.mxu0 0.0
  %1623 = vmatpush1.msra.mxu0 0.0
  %1624 = vmatprep.subr.mxu0 0.0
  %1625 = vmatpush1.msra.mxu0 0.0
  %1626 = vmatprep.subr.mxu0 0.0
  %1627 = vmatpush1.msra.mxu0 0.0
  %1628 = vmatprep.subr.mxu0 0.0
  %1629 = vmatpush1.msra.mxu0 0.0
  %1630 = vmatprep.subr.mxu0 0.0
  %1631 = vmatpush1.msra.mxu0 0.0
  %1632 = vmatprep.mubr.f32.mxu0 0.0
  %1633 = vmatmul.mubr.f32.gmra.mrb[0].mxu0 %v1449
  %v1634 = vpop.f32.mrb[0].mxu0
  %v1635 = vadd.f32 %v1565, %v1634
  %v1636 = vpop.f32.mrb[0].mxu0
  %1637 = vdwg.mxu0
  %v1638 = vld [vmem:[%s4] sm:$0x3]
  %v1639 = vld [vmem:[%s5] sm:$0x3]
  %v1641 = vsel %vm47, %v1638, 0
  %1643 = vmatprep.subr.mxu0 0.0
  %1644 = vmatpush1.msra.mxu0 %v1635
  %1645 = vmatprep.subr.mxu0 0.0
  %1646 = vmatpush1.msra.mxu0 0.0
  %1647 = vmatprep.subr.mxu0 0.0
  %1648 = vmatpush1.msra.mxu0 0.0
  %1649 = vmatprep.subr.mxu0 0.0
  %1650 = vmatpush1.msra.mxu0 0.0
  %1651 = vmatprep.subr.mxu0 0.0
  %1652 = vmatpush1.msra.mxu0 0.0
  %1653 = vmatprep.subr.mxu0 0.0
  %1654 = vmatpush1.msra.mxu0 0.0
  %1655 = vmatprep.subr.mxu0 0.0
  %1656 = vmatpush1.msra.mxu0 0.0
  %1657 = vmatprep.subr.mxu0 0.0
  %1658 = vmatpush1.msra.mxu0 0.0
  %1659 = vmatprep.subr.mxu0 0.0
  %1660 = vmatpush1.msra.mxu0 0.0
  %1661 = vmatprep.subr.mxu0 0.0
  %1662 = vmatpush1.msra.mxu0 0.0
  %1663 = vmatprep.subr.mxu0 0.0
  %1664 = vmatpush1.msra.mxu0 0.0
  %1665 = vmatprep.subr.mxu0 0.0
  %1666 = vmatpush1.msra.mxu0 0.0
  %1667 = vmatprep.subr.mxu0 0.0
  %1668 = vmatpush1.msra.mxu0 0.0
  %1669 = vmatprep.subr.mxu0 0.0
  %1670 = vmatpush1.msra.mxu0 0.0
  %1671 = vmatprep.subr.mxu0 0.0
  %1672 = vmatpush1.msra.mxu0 0.0
  %1673 = vmatprep.subr.mxu0 0.0
  %1674 = vmatpush1.msra.mxu0 0.0
  %1675 = vmatprep.subr.mxu0 0.0
  %1676 = vmatpush1.msra.mxu0 0.0
  %1677 = vmatprep.subr.mxu0 0.0
  %1678 = vmatpush1.msra.mxu0 0.0
  %1679 = vmatprep.subr.mxu0 0.0
  %1680 = vmatpush1.msra.mxu0 0.0
  %1681 = vmatprep.subr.mxu0 0.0
  %1682 = vmatpush1.msra.mxu0 0.0
  %1683 = vmatprep.subr.mxu0 0.0
  %1684 = vmatpush1.msra.mxu0 0.0
  %1685 = vmatprep.subr.mxu0 0.0
  %1686 = vmatpush1.msra.mxu0 0.0
  %1687 = vmatprep.subr.mxu0 0.0
  %1688 = vmatpush1.msra.mxu0 0.0
  %1689 = vmatprep.subr.mxu0 0.0
  %1690 = vmatpush1.msra.mxu0 0.0
  %1691 = vmatprep.subr.mxu0 0.0
  %1692 = vmatpush1.msra.mxu0 0.0
  %1693 = vmatprep.subr.mxu0 0.0
  %1694 = vmatpush1.msra.mxu0 0.0
  %1695 = vmatprep.subr.mxu0 0.0
  %1696 = vmatpush1.msra.mxu0 0.0
  %1697 = vmatprep.subr.mxu0 0.0
  %1698 = vmatpush1.msra.mxu0 0.0
  %1699 = vmatprep.subr.mxu0 0.0
  %1700 = vmatpush1.msra.mxu0 0.0
  %1701 = vmatprep.subr.mxu0 0.0
  %1702 = vmatpush1.msra.mxu0 0.0
  %1703 = vmatprep.subr.mxu0 0.0
  %1704 = vmatpush1.msra.mxu0 0.0
  %1705 = vmatprep.subr.mxu0 0.0
  %1706 = vmatpush1.msra.mxu0 0.0
  %1707 = vmatprep.mubr.f32.mxu0 0.0
  %1708 = vmatmul.mubr.f32.gmra.mrb[0].mxu0 %v1641
  %v1709 = vpop.f32.mrb[0].mxu0
  %v1710 = vadd.f32 %v1639, %v1709
  %v1711 = vpop.f32.mrb[0].mxu0
  %1712 = vdwg.mxu0
  %vm1713 = vcmask 1024
  %1714 = vst.msk [vmem:[%s6] sm:$0x3] %vm1713, %v1710
  // Predicated region
  $region26: #{tpu_custom_call.1} parent=0 // pred_check
    _
  $region27: #{tpu_custom_call.1} parent=0 // pred_check_branch
    %1716 = sbr.rel (0) target = $region29
  $region28: #{tpu_custom_call.1} parent=0 // pred_region
    _
  $region29: #{tpu_custom_call.1} parent=0 // pred_fallthru
    _
  // Predicated region
  $region30: #{tpu_custom_call.1} parent=0 // pred_check
    _
  $region31: #{tpu_custom_call.1} parent=0 // pred_check_branch
    %1718 = sbr.rel (0) target = $region33
  $region32: #{tpu_custom_call.1} parent=0 // pred_region
    _
  $region33: #{tpu_custom_call.1} parent=0 // pred_fallthru
    _

</llo_original>
